<compile_context>
chip_gen: v7x
topology: tpu7x:2x2x1
jax: 0.10.0
libtpu: 0.0.40
codegen_flags: <defaults>
</compile_context>

<pallas_src>
import functools

import jax
import jax.numpy as jnp
from jax.experimental import pallas as pl
from jax.experimental.pallas import tpu as pltpu


def _round_up(a: int, m: int) -> int:
    return ((a + m - 1) // m) * m


def _erf_approx(x, *, approx_recip):
    # Abramowitz & Stegun 7.1.26 rational approximation, |err| <= 1.5e-7 (f32).
    # Uses only exp + basic VPU arithmetic (guaranteed to lower on Mosaic).
    a1, a2, a3, a4, a5 = (0.254829592, -0.284496736, 1.421413741,
                          -1.453152027, 1.061405429)
    p = 0.3275911
    ax = jnp.abs(x)
    denom = 1.0 + p * ax
    if approx_recip:
        # EUP reciprocal (separate issue slot -> nearly free); only used on the
        # relaxed-tolerance (bf16-operand) path.
        t = pl.reciprocal(denom.astype(jnp.float32), approx=True).astype(x.dtype)
    else:
        t = 1.0 / denom
    poly = ((((a5 * t + a4) * t + a3) * t + a2) * t + a1) * t
    y = 1.0 - poly * jnp.exp(-ax * ax)
    return jnp.where(x >= 0, y, -y)


def _gelu_exact(x, *, approx_recip):
    # PyTorch nn.GELU() default: 0.5 * x * (1 + erf(x / sqrt(2)))
    inv_sqrt2 = 0.7071067811865476
    return 0.5 * x * (1.0 + _erf_approx(x * inv_sqrt2, approx_recip=approx_recip))


def _gelu_policy(compute_dtype):
    """Pick (gelu_dtype, approx_recip) for the intermediate GELU path.

    * Strict f32 operands: f32 math + exact divide (keeps tight tolerance).
    * bf16 operands on v6e/v7x (bf16 VPU/EUP): bf16 GELU halves VALU/EUP work.
    * bf16 operands on v5e and older (no bf16 VPU/EUP): keep f32 math.
    """
    if jnp.dtype(compute_dtype) != jnp.dtype(jnp.bfloat16):
        return jnp.float32, False
    try:
        kind = jax.devices()[0].device_kind.lower()
    except Exception:  # pragma: no cover - defensive
        kind = ""
    old_gen = any(tag in kind for tag in ("v2", "v3", "v4", "v5"))
    return (jnp.float32 if old_gen else jnp.bfloat16), True


def _ffn_kernel(x_ref, gamma_ref, beta_ref, w1_ref, b1_ref, w2_ref, b2_ref,
                o_ref, xn_ref, acc_ref, *, eps, dim_true, gelu_dtype,
                approx_recip):
    """Grid = (row tiles, hidden-dim chunks). Hidden axis is a reduction."""
    k = pl.program_id(1)

    @pl.when(k == 0)
    def _():
        # ---- LayerNorm over the TRUE feature dim (f32 statistics) ----
        x = x_ref[...].astype(jnp.float32)                       # (TM, Dp)
        inv_d = 1.0 / dim_true
        mean = jnp.sum(x, axis=-1, keepdims=True) * inv_d        # zero-padded
        xc = x - mean
        if x.shape[-1] != dim_true:
            # Padded lanes became -mean after centering; zero them so the
            # variance (and everything downstream) only sees real lanes.
            lane = jax.lax.broadcasted_iota(jnp.int32, (1, x.shape[-1]), 1)
            xc = jnp.where(lane < dim_true, xc, 0.0)
        var = jnp.sum(xc * xc, axis=-1, keepdims=True) * inv_d
        inv = jax.lax.rsqrt(var + eps)
        xn = xc * inv * gamma_ref[...].astype(jnp.float32) \
            + beta_ref[...].astype(jnp.float32)
        # Cache LN output (in the MXU operand dtype) for all hidden chunks.
        xn_ref[...] = xn.astype(xn_ref.dtype)
        acc_ref[...] = jnp.zeros_like(acc_ref)

    # ---- Linear(dim -> hidden chunk): MXU in weight dtype, f32 accumulate ----
    h = jnp.dot(xn_ref[...], w1_ref[...], preferred_element_type=jnp.float32)

    # ---- bias + exact GELU (erf formulation, PyTorch nn.GELU default) ----
    h = h.astype(gelu_dtype) + b1_ref[...].astype(gelu_dtype)    # (TM, TH)
    h = _gelu_exact(h, approx_recip=approx_recip)

    # ---- Linear(hidden chunk -> dim): accumulate into f32 VMEM scratch ----
    acc_ref[...] += jnp.dot(h.astype(w2_ref.dtype), w2_ref[...],
                            preferred_element_type=jnp.float32)

    @pl.when(k == pl.num_programs(1) - 1)
    def _():
        y = acc_ref[...] + b2_ref[...].astype(jnp.float32)       # (TM, Dp)
        o_ref[...] = y.astype(o_ref.dtype)


def feedforward_forward(x, gamma, beta, w1, b1, w2, b2, *, eps=1e-5,
                        block_rows=512, block_hidden=512,
                        cast_operands_to_bf16=False):
    """FeedForward forward pass.

    x: (B, N, D). w1: (D, H) pre-transposed from PyTorch's (H, D). b1: (H,).
    w2: (H, D) pre-transposed from PyTorch's (D, H). b2: (D,).
    gamma/beta: LayerNorm weight/bias, (D,).
    """
    B, N, D = x.shape
    H = w1.shape[1]
    assert w1.shape == (D, H) and w2.shape == (H, D)
    assert b1.shape == (H,) and b2.shape == (D,)

    if cast_operands_to_bf16:
        # Production fast path: MXU bf16 rates with f32 accumulation.
        w1 = w1.astype(jnp.bfloat16)
        w2 = w2.astype(jnp.bfloat16)
    compute_dtype = jnp.dtype(w1.dtype)
    out_dtype = x.dtype

    M = B * N
    x2 = x.reshape(M, D)

    # ---- Row tile: many (batch, patch) rows per grid step. ----
    TM = _round_up(min(block_rows, _round_up(M, 8)), 8)
    # Ensure >= 2 row steps when possible (megacore / v7x two-TC sharding).
    if M > 8 and _round_up(M, TM) // TM < 2:
        TM = _round_up((M + 1) // 2, 8)
    M_pad = _round_up(M, TM)

    # ---- Lane-dense feature dims; hidden-dim chunking. ----
    Dp = _round_up(D, 128)                      # input & output feature pad
    H_pad = _round_up(H, 128)
    TH = _round_up(min(block_hidden, H_pad), 128)
    H_pad = _round_up(H_pad, TH)                # make TH divide H_pad

    # ---- Zero-pad operands (padding never changes the math). ----
    x2 = jnp.pad(x2, ((0, M_pad - M), (0, Dp - D)))
    gamma2 = jnp.pad(gamma, (0, Dp - D)).reshape(1, Dp)
    beta2 = jnp.pad(beta, (0, Dp - D)).reshape(1, Dp)
    w1p = jnp.pad(w1, ((0, Dp - D), (0, H_pad - H)))
    b1p = jnp.pad(b1, (0, H_pad - H)).reshape(1, H_pad)
    w2p = jnp.pad(w2, ((0, H_pad - H), (0, Dp - D)))
    b2p = jnp.pad(b2, (0, Dp - D)).reshape(1, Dp)

    gelu_dtype, approx_recip = _gelu_policy(compute_dtype)
    kernel = functools.partial(_ffn_kernel, eps=eps, dim_true=D,
                               gelu_dtype=gelu_dtype,
                               approx_recip=approx_recip)

    # ---- Explicit VMEM budget from the actual buffer sizes. ----
    def _bytes(n, dt):
        return int(n) * jnp.dtype(dt).itemsize

    est = (
        2 * _bytes(TM * Dp, x2.dtype)            # input rows (double-buffered)
        + 2 * _bytes(TM * Dp, out_dtype)         # output rows (double-buffered)
        + 2 * _bytes(Dp * TH, w1p.dtype)         # W1 chunk (double-buffered)
        + 2 * _bytes(TH, b1p.dtype)              # b1 chunk
        + 2 * _bytes(TH * Dp, w2p.dtype)         # W2 chunk (double-buffered)
        + _bytes(Dp, gamma2.dtype) + _bytes(Dp, beta2.dtype)
        + _bytes(Dp, b2p.dtype)                  # invariants, single-buffered
        + _bytes(TM * Dp, compute_dtype)         # cached LN output scratch
        + _bytes(TM * Dp, jnp.float32)           # f32 output accumulator
        + 2 * _bytes(TM * TH, jnp.float32)       # matmul intermediate headroom
    )
    vmem_limit = int(min(max(2 * est + (4 << 20), 24 << 20), 48 << 20))

    def _run(single_buffer_invariants):
        if single_buffer_invariants:
            def inv_spec(shape):
                # Constant index map -> single buffer halves their VMEM.
                return pl.BlockSpec(shape, lambda i, k: (0, 0),
                                    pipeline_mode=pl.Buffered(1))
        else:
            def inv_spec(shape):
                return pl.BlockSpec(shape, lambda i, k: (0, 0))

        return pl.pallas_call(
            kernel,
            out_shape=jax.ShapeDtypeStruct((M_pad, Dp), out_dtype),
            grid_spec=pltpu.PrefetchScalarGridSpec(
                num_scalar_prefetch=0,
                grid=(M_pad // TM, H_pad // TH),
                in_specs=[
                    pl.BlockSpec((TM, Dp), lambda i, k: (i, 0)),   # x rows
                    inv_spec((1, Dp)),                             # LN gamma
                    inv_spec((1, Dp)),                             # LN beta
                    pl.BlockSpec((Dp, TH), lambda i, k: (0, k)),   # W1 chunk
                    pl.BlockSpec((1, TH), lambda i, k: (0, k)),    # b1 chunk
                    pl.BlockSpec((TH, Dp), lambda i, k: (k, 0)),   # W2 chunk
                    inv_spec((1, Dp)),                             # b2
                ],
                out_specs=pl.BlockSpec((TM, Dp), lambda i, k: (i, 0)),
                scratch_shapes=[
                    pltpu.VMEM((TM, Dp), compute_dtype),   # cached LN output
                    pltpu.VMEM((TM, Dp), jnp.float32),     # output accumulator
                ],
            ),
            compiler_params=pltpu.CompilerParams(
                dimension_semantics=("parallel", "arbitrary"),
                vmem_limit_bytes=vmem_limit,
            ),
        )(x2, gamma2, beta2, w1p, b1p, w2p, b2p)

    try:
        out = _run(True)
    except Exception:
        # Fallback if pl.Buffered(1) is unsupported by this JAX/Mosaic build.
        out = _run(False)

    return out[:M, :D].reshape(B, N, D)


def feedforward_reference(x, gamma, beta, w1, b1, w2, b2, *, eps=1e-5):
    """Pure-JAX reference mirroring the PyTorch forward (exact erf GELU)."""
    mean = jnp.mean(x, axis=-1, keepdims=True)
    var = jnp.mean((x - mean) ** 2, axis=-1, keepdims=True)
    xn = (x - mean) * jax.lax.rsqrt(var + eps) * gamma + beta
    h = jax.nn.gelu(xn @ w1 + b1, approximate=False)
    return h @ w2 + b2


if __name__ == "__main__":
    # Small shapes consistent with (size_batch, num_patch, num_dim).
    B, N, D, H = 2, 8, 32, 128

    key = jax.random.PRNGKey(0)
    kx, k1, kb1, k2, kb2 = jax.random.split(key, 5)

    x = jax.random.normal(kx, (B, N, D), dtype=jnp.float32)

    # LayerNorm params (PyTorch init: weight=1, bias=0).
    gamma = jnp.ones((D,), dtype=jnp.float32)
    beta = jnp.zeros((D,), dtype=jnp.float32)
    # nn.Linear(dim, hidden): weight (H, D) -> pass transposed (D, H), bias (H,)
    w1 = jax.random.normal(k1, (D, H), dtype=jnp.float32) * (D ** -0.5)
    b1 = jax.random.normal(kb1, (H,), dtype=jnp.float32) * 0.01
    # nn.Linear(hidden, dim): weight (D, H) -> pass transposed (H, D), bias (D,)
    w2 = jax.random.normal(k2, (H, D), dtype=jnp.float32) * (H ** -0.5)
    b2 = jax.random.normal(kb2, (D,), dtype=jnp.float32) * 0.01

    y_ref = feedforward_reference(x, gamma, beta, w1, b1, w2, b2)

    # f32 path (tight tolerance).
    y = feedforward_forward(x, gamma, beta, w1, b1, w2, b2)
    y = jax.block_until_ready(y)
    assert y.shape == (B, N, D)
    assert jnp.allclose(y, y_ref, atol=1e-4, rtol=1e-4), "f32 mismatch vs reference"

    # Exercise the hidden-dim reduction grid axis (3 chunks) + multiple row steps.
    H2 = 384
    k3, kb3, k4, kb4 = jax.random.split(jax.random.PRNGKey(1), 4)
    w1b = jax.random.normal(k3, (D, H2), dtype=jnp.float32) * (D ** -0.5)
    b1b = jax.random.normal(kb3, (H2,), dtype=jnp.float32) * 0.01
    w2b = jax.random.normal(k4, (H2, D), dtype=jnp.float32) * (H2 ** -0.5)
    b2b = jax.random.normal(kb4, (D,), dtype=jnp.float32) * 0.01
    y2_ref = feedforward_reference(x, gamma, beta, w1b, b1b, w2b, b2b)
    y2 = feedforward_forward(x, gamma, beta, w1b, b1b, w2b, b2b,
                             block_rows=8, block_hidden=128)
    y2 = jax.block_until_ready(y2)
    assert jnp.allclose(y2, y2_ref, atol=1e-4, rtol=1e-4), \
        "f32 mismatch vs reference (hidden-chunked path)"

    # bf16-operand path (MXU-native dtype; f32 accumulation) — looser tolerance.
    yb = feedforward_forward(x.astype(jnp.bfloat16), gamma, beta,
                             w1.astype(jnp.bfloat16), b1,
                             w2.astype(jnp.bfloat16), b2)
    yb = jax.block_until_ready(yb)
    assert jnp.allclose(yb.astype(jnp.float32), y_ref, atol=5e-2, rtol=5e-2), \
        "bf16 mismatch vs reference"

    print("KERNEL_OK")
</pallas_src>

<mosaic_0001>
module attributes {stable_mosaic.version = 11 : i64} {
  func.func @_ffn_kernel(%arg0: i32, %arg1: i32, %arg2: memref<8x128xf32, #tpu.memory_space<vmem>>, %arg3: memref<1x128xf32, #tpu.memory_space<vmem>>, %arg4: memref<1x128xf32, #tpu.memory_space<vmem>>, %arg5: memref<128x128xf32, #tpu.memory_space<vmem>>, %arg6: memref<1x128xf32, #tpu.memory_space<vmem>>, %arg7: memref<128x128xf32, #tpu.memory_space<vmem>>, %arg8: memref<1x128xf32, #tpu.memory_space<vmem>>, %arg9: memref<8x128xf32, #tpu.memory_space<vmem>>, %arg10: memref<8x128xf32, #tpu.memory_space<vmem>>, %arg11: memref<8x128xf32, #tpu.memory_space<vmem>>) attributes {dimension_semantics = [#tpu.dimension_semantics<parallel>, #tpu.dimension_semantics<arbitrary>], iteration_bounds = array<i64: 2, 1>, scalar_prefetch = 0 : i64, scratch_operands = 2 : i64, tpu.core_type = #tpu.core_type<tc>, window_params = [{transform_indices = @transform_0, window_bounds = array<i64: 8, 128>}, {pipeline_mode = #tpu.pipeline_mode<synchronous>, transform_indices = @transform_1, window_bounds = array<i64: 1, 128>}, {pipeline_mode = #tpu.pipeline_mode<synchronous>, transform_indices = @transform_2, window_bounds = array<i64: 1, 128>}, {transform_indices = @transform_3, window_bounds = array<i64: 128, 128>}, {transform_indices = @transform_4, window_bounds = array<i64: 1, 128>}, {transform_indices = @transform_5, window_bounds = array<i64: 128, 128>}, {pipeline_mode = #tpu.pipeline_mode<synchronous>, transform_indices = @transform_6, window_bounds = array<i64: 1, 128>}, {transform_indices = @transform_7, window_bounds = array<i64: 8, 128>}]} {
    %c0_i32 = arith.constant 0 : i32
    %0 = arith.cmpi eq, %arg1, %c0_i32 : i32
    %1 = arith.extui %0 : i1 to i32
    %c0_i32_0 = arith.constant 0 : i32
    %2 = arith.cmpi ne, %1, %c0_i32_0 : i32
    scf.if %2 {
      %c0_30 = arith.constant 0 : index
      %c0_31 = arith.constant 0 : index
      %57 = vector.load %arg2[%c0_30, %c0_31] : memref<8x128xf32, #tpu.memory_space<vmem>>, vector<8x128xf32>
      %cst_32 = arith.constant dense<0.000000e+00> : vector<8xf32>
      %58 = vector.multi_reduction <add>, %57, %cst_32 [1] : vector<8x128xf32> to vector<8xf32>
      %59 = vector.shape_cast %58 : vector<8xf32> to vector<8x1xf32>
      %cst_33 = arith.constant 3.125000e-02 : f32
      %60 = vector.broadcast %cst_33 : f32 to vector<8x1xf32>
      %61 = arith.mulf %59, %60 : vector<8x1xf32>
      %62 = vector.broadcast %61 : vector<8x1xf32> to vector<8x128xf32>
      %63 = arith.subf %57, %62 : vector<8x128xf32>
      %64 = tpu.iota {dimensions = array<i32: 1>} : vector<1x128xi32>
      %c32_i32 = arith.constant 32 : i32
      %65 = vector.broadcast %c32_i32 : i32 to vector<1x128xi32>
      %66 = arith.cmpi slt, %64, %65 : vector<1x128xi32>
      %cst_34 = arith.constant 0.000000e+00 : f32
      %67 = vector.shape_cast %66 : vector<1x128xi1> to vector<1x128xi1>
      %68 = vector.broadcast %67 : vector<1x128xi1> to vector<8x128xi1>
      %69 = vector.broadcast %cst_34 : f32 to vector<8x128xf32>
      %70 = arith.select %68, %63, %69 : vector<8x128xi1>, vector<8x128xf32>
      %71 = arith.mulf %70, %70 : vector<8x128xf32>
      %cst_35 = arith.constant dense<0.000000e+00> : vector<8xf32>
      %72 = vector.multi_reduction <add>, %71, %cst_35 [1] : vector<8x128xf32> to vector<8xf32>
      %73 = vector.shape_cast %72 : vector<8xf32> to vector<8x1xf32>
      %cst_36 = arith.constant 3.125000e-02 : f32
      %74 = vector.broadcast %cst_36 : f32 to vector<8x1xf32>
      %75 = arith.mulf %73, %74 : vector<8x1xf32>
      %cst_37 = arith.constant 9.99999974E-6 : f32
      %76 = vector.broadcast %cst_37 : f32 to vector<8x1xf32>
      %77 = arith.addf %75, %76 : vector<8x1xf32>
      %78 = math.rsqrt %77 : vector<8x1xf32>
      %79 = vector.broadcast %78 : vector<8x1xf32> to vector<8x128xf32>
      %80 = arith.mulf %70, %79 : vector<8x128xf32>
      %c0_38 = arith.constant 0 : index
      %c0_39 = arith.constant 0 : index
      %81 = vector.load %arg3[%c0_38, %c0_39] : memref<1x128xf32, #tpu.memory_space<vmem>>, vector<1x128xf32>
      %82 = vector.broadcast %81 : vector<1x128xf32> to vector<8x128xf32>
      %83 = arith.mulf %80, %82 : vector<8x128xf32>
      %c0_40 = arith.constant 0 : index
      %c0_41 = arith.constant 0 : index
      %84 = vector.load %arg4[%c0_40, %c0_41] : memref<1x128xf32, #tpu.memory_space<vmem>>, vector<1x128xf32>
      %85 = vector.broadcast %84 : vector<1x128xf32> to vector<8x128xf32>
      %86 = arith.addf %83, %85 : vector<8x128xf32>
      %c0_42 = arith.constant 0 : index
      %c0_43 = arith.constant 0 : index
      %87 = vector.load %arg10[%c0_42, %c0_43] : memref<8x128xf32, #tpu.memory_space<vmem>>, vector<8x128xf32>
      tpu.vector_store %arg10[%c0_42, %c0_43], %86 {strides = array<i32>} : memref<8x128xf32, #tpu.memory_space<vmem>>, vector<8x128xf32>,
      %cst_44 = arith.constant 0.000000e+00 : f32
      %88 = vector.broadcast %cst_44 : f32 to vector<8x128xf32>
      %c0_45 = arith.constant 0 : index
      %c0_46 = arith.constant 0 : index
      %89 = vector.load %arg11[%c0_45, %c0_46] : memref<8x128xf32, #tpu.memory_space<vmem>>, vector<8x128xf32>
      tpu.vector_store %arg11[%c0_45, %c0_46], %88 {strides = array<i32>} : memref<8x128xf32, #tpu.memory_space<vmem>>, vector<8x128xf32>,
    } else {
    }
    %c0 = arith.constant 0 : index
    %c0_1 = arith.constant 0 : index
    %3 = vector.load %arg10[%c0, %c0_1] : memref<8x128xf32, #tpu.memory_space<vmem>>, vector<8x128xf32>
    %c0_2 = arith.constant 0 : index
    %c0_3 = arith.constant 0 : index
    %4 = vector.load %arg5[%c0_2, %c0_3] : memref<128x128xf32, #tpu.memory_space<vmem>>, vector<128x128xf32>
    %cst = arith.constant dense<0.000000e+00> : vector<8x128xf32>
    %5 = tpu.matmul %3, %4, %cst {dimension_numbers = #tpu.dot_dimension_numbers<[1], [0], [0], [1], [0, 0, 1, 1], [], []>} : vector<8x128xf32>, vector<128x128xf32>, vector<8x128xf32> -> vector<8x128xf32>
    %c0_4 = arith.constant 0 : index
    %c0_5 = arith.constant 0 : index
    %6 = vector.load %arg6[%c0_4, %c0_5] : memref<1x128xf32, #tpu.memory_space<vmem>>, vector<1x128xf32>
    %7 = vector.broadcast %6 : vector<1x128xf32> to vector<8x128xf32>
    %8 = arith.addf %5, %7 : vector<8x128xf32>
    %cst_6 = arith.constant 5.000000e-01 : f32
    %9 = vector.broadcast %cst_6 : f32 to vector<8x128xf32>
    %10 = arith.mulf %9, %8 : vector<8x128xf32>
    %cst_7 = arith.constant 0.707106769 : f32
    %11 = vector.broadcast %cst_7 : f32 to vector<8x128xf32>
    %12 = arith.mulf %8, %11 : vector<8x128xf32>
    %13 = math.absf %12 : vector<8x128xf32>
    %cst_8 = arith.constant 0.327591091 : f32
    %14 = vector.broadcast %cst_8 : f32 to vector<8x128xf32>
    %15 = arith.mulf %14, %13 : vector<8x128xf32>
    %cst_9 = arith.constant 1.000000e+00 : f32
    %16 = vector.broadcast %cst_9 : f32 to vector<8x128xf32>
    %17 = arith.addf %16, %15 : vector<8x128xf32>
    %cst_10 = arith.constant 1.000000e+00 : f32
    %18 = vector.broadcast %cst_10 : f32 to vector<8x128xf32>
    %19 = arith.divf %18, %17 : vector<8x128xf32>
    %cst_11 = arith.constant 1.06140542 : f32
    %20 = vector.broadcast %cst_11 : f32 to vector<8x128xf32>
    %21 = arith.mulf %20, %19 : vector<8x128xf32>
    %cst_12 = arith.constant -1.45315206 : f32
    %22 = vector.broadcast %cst_12 : f32 to vector<8x128xf32>
    %23 = arith.addf %21, %22 : vector<8x128xf32>
    %24 = arith.mulf %23, %19 : vector<8x128xf32>
    %cst_13 = arith.constant 1.42141378 : f32
    %25 = vector.broadcast %cst_13 : f32 to vector<8x128xf32>
    %26 = arith.addf %24, %25 : vector<8x128xf32>
    %27 = arith.mulf %26, %19 : vector<8x128xf32>
    %cst_14 = arith.constant -0.284496725 : f32
    %28 = vector.broadcast %cst_14 : f32 to vector<8x128xf32>
    %29 = arith.addf %27, %28 : vector<8x128xf32>
    %30 = arith.mulf %29, %19 : vector<8x128xf32>
    %cst_15 = arith.constant 0.254829586 : f32
    %31 = vector.broadcast %cst_15 : f32 to vector<8x128xf32>
    %32 = arith.addf %30, %31 : vector<8x128xf32>
    %33 = arith.mulf %32, %19 : vector<8x128xf32>
    %cst_16 = arith.constant 0.000000e+00 : f32
    %34 = vector.broadcast %cst_16 : f32 to vector<8x128xf32>
    %35 = arith.subf %34, %13 : vector<8x128xf32>
    %36 = arith.mulf %35, %13 : vector<8x128xf32>
    %37 = math.exp %36 : vector<8x128xf32>
    %38 = arith.mulf %33, %37 : vector<8x128xf32>
    %cst_17 = arith.constant 1.000000e+00 : f32
    %39 = vector.broadcast %cst_17 : f32 to vector<8x128xf32>
    %40 = arith.subf %39, %38 : vector<8x128xf32>
    %cst_18 = arith.constant 0.000000e+00 : f32
    %41 = vector.broadcast %cst_18 : f32 to vector<8x128xf32>
    %42 = arith.cmpf oge, %12, %41 : vector<8x128xf32>
    %cst_19 = arith.constant 0.000000e+00 : f32
    %43 = vector.broadcast %cst_19 : f32 to vector<8x128xf32>
    %44 = arith.subf %43, %40 : vector<8x128xf32>
    %45 = arith.select %42, %40, %44 : vector<8x128xi1>, vector<8x128xf32>
    %cst_20 = arith.constant 1.000000e+00 : f32
    %46 = vector.broadcast %cst_20 : f32 to vector<8x128xf32>
    %47 = arith.addf %46, %45 : vector<8x128xf32>
    %48 = arith.mulf %10, %47 : vector<8x128xf32>
    %c0_21 = arith.constant 0 : index
    %c0_22 = arith.constant 0 : index
    %49 = vector.load %arg11[%c0_21, %c0_22] : memref<8x128xf32, #tpu.memory_space<vmem>>, vector<8x128xf32>
    %c0_23 = arith.constant 0 : index
    %c0_24 = arith.constant 0 : index
    %50 = vector.load %arg7[%c0_23, %c0_24] : memref<128x128xf32, #tpu.memory_space<vmem>>, vector<128x128xf32>
    %cst_25 = arith.constant dense<0.000000e+00> : vector<8x128xf32>
    %51 = tpu.matmul %48, %50, %cst_25 {dimension_numbers = #tpu.dot_dimension_numbers<[1], [0], [0], [1], [0, 0, 1, 1], [], []>} : vector<8x128xf32>, vector<128x128xf32>, vector<8x128xf32> -> vector<8x128xf32>
    %52 = arith.addf %49, %51 : vector<8x128xf32>
    %c0_26 = arith.constant 0 : index
    %c0_27 = arith.constant 0 : index
    %53 = vector.load %arg11[%c0_26, %c0_27] : memref<8x128xf32, #tpu.memory_space<vmem>>, vector<8x128xf32>
    tpu.vector_store %arg11[%c0_26, %c0_27], %52 {strides = array<i32>} : memref<8x128xf32, #tpu.memory_space<vmem>>, vector<8x128xf32>,
    %c0_i32_28 = arith.constant 0 : i32
    %54 = arith.cmpi eq, %arg1, %c0_i32_28 : i32
    %55 = arith.extui %54 : i1 to i32
    %c0_i32_29 = arith.constant 0 : i32
    %56 = arith.cmpi ne, %55, %c0_i32_29 : i32
    scf.if %56 {
      %c0_30 = arith.constant 0 : index
      %c0_31 = arith.constant 0 : index
      %57 = vector.load %arg11[%c0_30, %c0_31] : memref<8x128xf32, #tpu.memory_space<vmem>>, vector<8x128xf32>
      %c0_32 = arith.constant 0 : index
      %c0_33 = arith.constant 0 : index
      %58 = vector.load %arg8[%c0_32, %c0_33] : memref<1x128xf32, #tpu.memory_space<vmem>>, vector<1x128xf32>
      %59 = vector.broadcast %58 : vector<1x128xf32> to vector<8x128xf32>
      %60 = arith.addf %57, %59 : vector<8x128xf32>
      %c0_34 = arith.constant 0 : index
      %c0_35 = arith.constant 0 : index
      %61 = vector.load %arg9[%c0_34, %c0_35] : memref<8x128xf32, #tpu.memory_space<vmem>>, vector<8x128xf32>
      tpu.vector_store %arg9[%c0_34, %c0_35], %60 {strides = array<i32>} : memref<8x128xf32, #tpu.memory_space<vmem>>, vector<8x128xf32>,
    } else {
    }
    return
  }
  func.func @transform_0(%arg0: i32, %arg1: i32) -> (i32, i32) {
    %c0_i32 = arith.constant 0 : i32
    %c0_i32_0 = arith.constant 0 : i32
    return %arg0, %c0_i32 : i32, i32
  }
  func.func @transform_1(%arg0: i32, %arg1: i32) -> (i32, i32) {
    %c0_i32 = arith.constant 0 : i32
    %c0_i32_0 = arith.constant 0 : i32
    %c0_i32_1 = arith.constant 0 : i32
    return %c0_i32, %c0_i32_0 : i32, i32
  }
  func.func @transform_2(%arg0: i32, %arg1: i32) -> (i32, i32) {
    %c0_i32 = arith.constant 0 : i32
    %c0_i32_0 = arith.constant 0 : i32
    %c0_i32_1 = arith.constant 0 : i32
    return %c0_i32, %c0_i32_0 : i32, i32
  }
  func.func @transform_3(%arg0: i32, %arg1: i32) -> (i32, i32) {
    %c0_i32 = arith.constant 0 : i32
    %c0_i32_0 = arith.constant 0 : i32
    return %c0_i32, %arg1 : i32, i32
  }
  func.func @transform_4(%arg0: i32, %arg1: i32) -> (i32, i32) {
    %c0_i32 = arith.constant 0 : i32
    %c0_i32_0 = arith.constant 0 : i32
    return %c0_i32, %arg1 : i32, i32
  }
  func.func @transform_5(%arg0: i32, %arg1: i32) -> (i32, i32) {
    %c0_i32 = arith.constant 0 : i32
    %c0_i32_0 = arith.constant 0 : i32
    return %arg1, %c0_i32 : i32, i32
  }
  func.func @transform_6(%arg0: i32, %arg1: i32) -> (i32, i32) {
    %c0_i32 = arith.constant 0 : i32
    %c0_i32_0 = arith.constant 0 : i32
    %c0_i32_1 = arith.constant 0 : i32
    return %c0_i32, %c0_i32_0 : i32, i32
  }
  func.func @transform_7(%arg0: i32, %arg1: i32) -> (i32, i32) {
    %c0_i32 = arith.constant 0 : i32
    %c0_i32_0 = arith.constant 0 : i32
    return %arg0, %c0_i32 : i32, i32
  }
}

module attributes {stable_mosaic.version = 11 : i64} {
  func.func @_ffn_kernel(%arg0: i32, %arg1: i32, %arg2: memref<8x128xf32, #tpu.memory_space<vmem>>, %arg3: memref<1x128xf32, #tpu.memory_space<vmem>>, %arg4: memref<1x128xf32, #tpu.memory_space<vmem>>, %arg5: memref<128x128xf32, #tpu.memory_space<vmem>>, %arg6: memref<1x128xf32, #tpu.memory_space<vmem>>, %arg7: memref<128x128xf32, #tpu.memory_space<vmem>>, %arg8: memref<1x128xf32, #tpu.memory_space<vmem>>, %arg9: memref<8x128xf32, #tpu.memory_space<vmem>>, %arg10: memref<8x128xf32, #tpu.memory_space<vmem>>, %arg11: memref<8x128xf32, #tpu.memory_space<vmem>>) attributes {dimension_semantics = [#tpu.dimension_semantics<parallel>, #tpu.dimension_semantics<arbitrary>], iteration_bounds = array<i64: 2, 1>, scalar_prefetch = 0 : i64, scratch_operands = 2 : i64, tpu.core_type = #tpu.core_type<tc>, window_params = [{transform_indices = @transform_0, window_bounds = array<i64: 8, 128>}, {pipeline_mode = #tpu.pipeline_mode<synchronous>, transform_indices = @transform_1, window_bounds = array<i64: 1, 128>}, {pipeline_mode = #tpu.pipeline_mode<synchronous>, transform_indices = @transform_2, window_bounds = array<i64: 1, 128>}, {transform_indices = @transform_3, window_bounds = array<i64: 128, 128>}, {transform_indices = @transform_4, window_bounds = array<i64: 1, 128>}, {transform_indices = @transform_5, window_bounds = array<i64: 128, 128>}, {pipeline_mode = #tpu.pipeline_mode<synchronous>, transform_indices = @transform_6, window_bounds = array<i64: 1, 128>}, {transform_indices = @transform_7, window_bounds = array<i64: 8, 128>}]} {
    %c0_i32 = arith.constant 0 : i32
    %0 = arith.cmpi eq, %arg1, %c0_i32 : i32
    %1 = arith.extui %0 : i1 to i32
    %c0_i32_0 = arith.constant 0 : i32
    %2 = arith.cmpi ne, %1, %c0_i32_0 : i32
    scf.if %2 {
      %c0_30 = arith.constant 0 : index
      %c0_31 = arith.constant 0 : index
      %57 = vector.load %arg2[%c0_30, %c0_31] : memref<8x128xf32, #tpu.memory_space<vmem>>, vector<8x128xf32>
      %cst_32 = arith.constant dense<0.000000e+00> : vector<8xf32>
      %58 = vector.multi_reduction <add>, %57, %cst_32 [1] : vector<8x128xf32> to vector<8xf32>
      %59 = vector.shape_cast %58 : vector<8xf32> to vector<8x1xf32>
      %cst_33 = arith.constant 3.125000e-02 : f32
      %60 = vector.broadcast %cst_33 : f32 to vector<8x1xf32>
      %61 = arith.mulf %59, %60 : vector<8x1xf32>
      %62 = vector.broadcast %61 : vector<8x1xf32> to vector<8x128xf32>
      %63 = arith.subf %57, %62 : vector<8x128xf32>
      %64 = tpu.iota {dimensions = array<i32: 1>} : vector<1x128xi32>
      %c32_i32 = arith.constant 32 : i32
      %65 = vector.broadcast %c32_i32 : i32 to vector<1x128xi32>
      %66 = arith.cmpi slt, %64, %65 : vector<1x128xi32>
      %cst_34 = arith.constant 0.000000e+00 : f32
      %67 = vector.shape_cast %66 : vector<1x128xi1> to vector<1x128xi1>
      %68 = vector.broadcast %67 : vector<1x128xi1> to vector<8x128xi1>
      %69 = vector.broadcast %cst_34 : f32 to vector<8x128xf32>
      %70 = arith.select %68, %63, %69 : vector<8x128xi1>, vector<8x128xf32>
      %71 = arith.mulf %70, %70 : vector<8x128xf32>
      %cst_35 = arith.constant dense<0.000000e+00> : vector<8xf32>
      %72 = vector.multi_reduction <add>, %71, %cst_35 [1] : vector<8x128xf32> to vector<8xf32>
      %73 = vector.shape_cast %72 : vector<8xf32> to vector<8x1xf32>
      %cst_36 = arith.constant 3.125000e-02 : f32
      %74 = vector.broadcast %cst_36 : f32 to vector<8x1xf32>
      %75 = arith.mulf %73, %74 : vector<8x1xf32>
      %cst_37 = arith.constant 9.99999974E-6 : f32
      %76 = vector.broadcast %cst_37 : f32 to vector<8x1xf32>
      %77 = arith.addf %75, %76 : vector<8x1xf32>
      %78 = math.rsqrt %77 : vector<8x1xf32>
      %79 = vector.broadcast %78 : vector<8x1xf32> to vector<8x128xf32>
      %80 = arith.mulf %70, %79 : vector<8x128xf32>
      %c0_38 = arith.constant 0 : index
      %c0_39 = arith.constant 0 : index
      %81 = vector.load %arg3[%c0_38, %c0_39] : memref<1x128xf32, #tpu.memory_space<vmem>>, vector<1x128xf32>
      %82 = vector.broadcast %81 : vector<1x128xf32> to vector<8x128xf32>
      %83 = arith.mulf %80, %82 : vector<8x128xf32>
      %c0_40 = arith.constant 0 : index
      %c0_41 = arith.constant 0 : index
      %84 = vector.load %arg4[%c0_40, %c0_41] : memref<1x128xf32, #tpu.memory_space<vmem>>, vector<1x128xf32>
      %85 = vector.broadcast %84 : vector<1x128xf32> to vector<8x128xf32>
      %86 = arith.addf %83, %85 : vector<8x128xf32>
      %c0_42 = arith.constant 0 : index
      %c0_43 = arith.constant 0 : index
      %87 = vector.load %arg10[%c0_42, %c0_43] : memref<8x128xf32, #tpu.memory_space<vmem>>, vector<8x128xf32>
      tpu.vector_store %arg10[%c0_42, %c0_43], %86 {strides = array<i32>} : memref<8x128xf32, #tpu.memory_space<vmem>>, vector<8x128xf32>,
      %cst_44 = arith.constant 0.000000e+00 : f32
      %88 = vector.broadcast %cst_44 : f32 to vector<8x128xf32>
      %c0_45 = arith.constant 0 : index
      %c0_46 = arith.constant 0 : index
      %89 = vector.load %arg11[%c0_45, %c0_46] : memref<8x128xf32, #tpu.memory_space<vmem>>, vector<8x128xf32>
      tpu.vector_store %arg11[%c0_45, %c0_46], %88 {strides = array<i32>} : memref<8x128xf32, #tpu.memory_space<vmem>>, vector<8x128xf32>,
    } else {
    }
    %c0 = arith.constant 0 : index
    %c0_1 = arith.constant 0 : index
    %3 = vector.load %arg10[%c0, %c0_1] : memref<8x128xf32, #tpu.memory_space<vmem>>, vector<8x128xf32>
    %c0_2 = arith.constant 0 : index
    %c0_3 = arith.constant 0 : index
    %4 = vector.load %arg5[%c0_2, %c0_3] : memref<128x128xf32, #tpu.memory_space<vmem>>, vector<128x128xf32>
    %cst = arith.constant dense<0.000000e+00> : vector<8x128xf32>
    %5 = tpu.matmul %3, %4, %cst {dimension_numbers = #tpu.dot_dimension_numbers<[1], [0], [0], [1], [0, 0, 1, 1], [], []>} : vector<8x128xf32>, vector<128x128xf32>, vector<8x128xf32> -> vector<8x128xf32>
    %c0_4 = arith.constant 0 : index
    %c0_5 = arith.constant 0 : index
    %6 = vector.load %arg6[%c0_4, %c0_5] : memref<1x128xf32, #tpu.memory_space<vmem>>, vector<1x128xf32>
    %7 = vector.broadcast %6 : vector<1x128xf32> to vector<8x128xf32>
    %8 = arith.addf %5, %7 : vector<8x128xf32>
    %cst_6 = arith.constant 5.000000e-01 : f32
    %9 = vector.broadcast %cst_6 : f32 to vector<8x128xf32>
    %10 = arith.mulf %9, %8 : vector<8x128xf32>
    %cst_7 = arith.constant 0.707106769 : f32
    %11 = vector.broadcast %cst_7 : f32 to vector<8x128xf32>
    %12 = arith.mulf %8, %11 : vector<8x128xf32>
    %13 = math.absf %12 : vector<8x128xf32>
    %cst_8 = arith.constant 0.327591091 : f32
    %14 = vector.broadcast %cst_8 : f32 to vector<8x128xf32>
    %15 = arith.mulf %14, %13 : vector<8x128xf32>
    %cst_9 = arith.constant 1.000000e+00 : f32
    %16 = vector.broadcast %cst_9 : f32 to vector<8x128xf32>
    %17 = arith.addf %16, %15 : vector<8x128xf32>
    %cst_10 = arith.constant 1.000000e+00 : f32
    %18 = vector.broadcast %cst_10 : f32 to vector<8x128xf32>
    %19 = arith.divf %18, %17 : vector<8x128xf32>
    %cst_11 = arith.constant 1.06140542 : f32
    %20 = vector.broadcast %cst_11 : f32 to vector<8x128xf32>
    %21 = arith.mulf %20, %19 : vector<8x128xf32>
    %cst_12 = arith.constant -1.45315206 : f32
    %22 = vector.broadcast %cst_12 : f32 to vector<8x128xf32>
    %23 = arith.addf %21, %22 : vector<8x128xf32>
    %24 = arith.mulf %23, %19 : vector<8x128xf32>
    %cst_13 = arith.constant 1.42141378 : f32
    %25 = vector.broadcast %cst_13 : f32 to vector<8x128xf32>
    %26 = arith.addf %24, %25 : vector<8x128xf32>
    %27 = arith.mulf %26, %19 : vector<8x128xf32>
    %cst_14 = arith.constant -0.284496725 : f32
    %28 = vector.broadcast %cst_14 : f32 to vector<8x128xf32>
    %29 = arith.addf %27, %28 : vector<8x128xf32>
    %30 = arith.mulf %29, %19 : vector<8x128xf32>
    %cst_15 = arith.constant 0.254829586 : f32
    %31 = vector.broadcast %cst_15 : f32 to vector<8x128xf32>
    %32 = arith.addf %30, %31 : vector<8x128xf32>
    %33 = arith.mulf %32, %19 : vector<8x128xf32>
    %cst_16 = arith.constant 0.000000e+00 : f32
    %34 = vector.broadcast %cst_16 : f32 to vector<8x128xf32>
    %35 = arith.subf %34, %13 : vector<8x128xf32>
    %36 = arith.mulf %35, %13 : vector<8x128xf32>
    %37 = math.exp %36 : vector<8x128xf32>
    %38 = arith.mulf %33, %37 : vector<8x128xf32>
    %cst_17 = arith.constant 1.000000e+00 : f32
    %39 = vector.broadcast %cst_17 : f32 to vector<8x128xf32>
    %40 = arith.subf %39, %38 : vector<8x128xf32>
    %cst_18 = arith.constant 0.000000e+00 : f32
    %41 = vector.broadcast %cst_18 : f32 to vector<8x128xf32>
    %42 = arith.cmpf oge, %12, %41 : vector<8x128xf32>
    %cst_19 = arith.constant 0.000000e+00 : f32
    %43 = vector.broadcast %cst_19 : f32 to vector<8x128xf32>
    %44 = arith.subf %43, %40 : vector<8x128xf32>
    %45 = arith.select %42, %40, %44 : vector<8x128xi1>, vector<8x128xf32>
    %cst_20 = arith.constant 1.000000e+00 : f32
    %46 = vector.broadcast %cst_20 : f32 to vector<8x128xf32>
    %47 = arith.addf %46, %45 : vector<8x128xf32>
    %48 = arith.mulf %10, %47 : vector<8x128xf32>
    %c0_21 = arith.constant 0 : index
    %c0_22 = arith.constant 0 : index
    %49 = vector.load %arg11[%c0_21, %c0_22] : memref<8x128xf32, #tpu.memory_space<vmem>>, vector<8x128xf32>
    %c0_23 = arith.constant 0 : index
    %c0_24 = arith.constant 0 : index
    %50 = vector.load %arg7[%c0_23, %c0_24] : memref<128x128xf32, #tpu.memory_space<vmem>>, vector<128x128xf32>
    %cst_25 = arith.constant dense<0.000000e+00> : vector<8x128xf32>
    %51 = tpu.matmul %48, %50, %cst_25 {dimension_numbers = #tpu.dot_dimension_numbers<[1], [0], [0], [1], [0, 0, 1, 1], [], []>} : vector<8x128xf32>, vector<128x128xf32>, vector<8x128xf32> -> vector<8x128xf32>
    %52 = arith.addf %49, %51 : vector<8x128xf32>
    %c0_26 = arith.constant 0 : index
    %c0_27 = arith.constant 0 : index
    %53 = vector.load %arg11[%c0_26, %c0_27] : memref<8x128xf32, #tpu.memory_space<vmem>>, vector<8x128xf32>
    tpu.vector_store %arg11[%c0_26, %c0_27], %52 {strides = array<i32>} : memref<8x128xf32, #tpu.memory_space<vmem>>, vector<8x128xf32>,
    %c0_i32_28 = arith.constant 0 : i32
    %54 = arith.cmpi eq, %arg1, %c0_i32_28 : i32
    %55 = arith.extui %54 : i1 to i32
    %c0_i32_29 = arith.constant 0 : i32
    %56 = arith.cmpi ne, %55, %c0_i32_29 : i32
    scf.if %56 {
      %c0_30 = arith.constant 0 : index
      %c0_31 = arith.constant 0 : index
      %57 = vector.load %arg11[%c0_30, %c0_31] : memref<8x128xf32, #tpu.memory_space<vmem>>, vector<8x128xf32>
      %c0_32 = arith.constant 0 : index
      %c0_33 = arith.constant 0 : index
      %58 = vector.load %arg8[%c0_32, %c0_33] : memref<1x128xf32, #tpu.memory_space<vmem>>, vector<1x128xf32>
      %59 = vector.broadcast %58 : vector<1x128xf32> to vector<8x128xf32>
      %60 = arith.addf %57, %59 : vector<8x128xf32>
      %c0_34 = arith.constant 0 : index
      %c0_35 = arith.constant 0 : index
      %61 = vector.load %arg9[%c0_34, %c0_35] : memref<8x128xf32, #tpu.memory_space<vmem>>, vector<8x128xf32>
      tpu.vector_store %arg9[%c0_34, %c0_35], %60 {strides = array<i32>} : memref<8x128xf32, #tpu.memory_space<vmem>>, vector<8x128xf32>,
    } else {
    }
    return
  }
  func.func @transform_0(%arg0: i32, %arg1: i32) -> (i32, i32) {
    %c0_i32 = arith.constant 0 : i32
    %c0_i32_0 = arith.constant 0 : i32
    return %arg0, %c0_i32 : i32, i32
  }
  func.func @transform_1(%arg0: i32, %arg1: i32) -> (i32, i32) {
    %c0_i32 = arith.constant 0 : i32
    %c0_i32_0 = arith.constant 0 : i32
    %c0_i32_1 = arith.constant 0 : i32
    return %c0_i32, %c0_i32_0 : i32, i32
  }
  func.func @transform_2(%arg0: i32, %arg1: i32) -> (i32, i32) {
    %c0_i32 = arith.constant 0 : i32
    %c0_i32_0 = arith.constant 0 : i32
    %c0_i32_1 = arith.constant 0 : i32
    return %c0_i32, %c0_i32_0 : i32, i32
  }
  func.func @transform_3(%arg0: i32, %arg1: i32) -> (i32, i32) {
    %c0_i32 = arith.constant 0 : i32
    %c0_i32_0 = arith.constant 0 : i32
    return %c0_i32, %arg1 : i32, i32
  }
  func.func @transform_4(%arg0: i32, %arg1: i32) -> (i32, i32) {
    %c0_i32 = arith.constant 0 : i32
    %c0_i32_0 = arith.constant 0 : i32
    return %c0_i32, %arg1 : i32, i32
  }
  func.func @transform_5(%arg0: i32, %arg1: i32) -> (i32, i32) {
    %c0_i32 = arith.constant 0 : i32
    %c0_i32_0 = arith.constant 0 : i32
    return %arg1, %c0_i32 : i32, i32
  }
  func.func @transform_6(%arg0: i32, %arg1: i32) -> (i32, i32) {
    %c0_i32 = arith.constant 0 : i32
    %c0_i32_0 = arith.constant 0 : i32
    %c0_i32_1 = arith.constant 0 : i32
    return %c0_i32, %c0_i32_0 : i32, i32
  }
  func.func @transform_7(%arg0: i32, %arg1: i32) -> (i32, i32) {
    %c0_i32 = arith.constant 0 : i32
    %c0_i32_0 = arith.constant 0 : i32
    return %arg0, %c0_i32 : i32, i32
  }
}

</mosaic_0001>

<llo_original>
// kernel: tpu_custom_call.1
$region0: #{tpu_custom_call.1}
  #allocation0 [shape = 'u32[]', space=smem, size = 0x4, offset = 0x4, fixed_abs, tag = 'smem constant byte address 0x4 - core index']
  #allocation1 [shape = 'u32[144,128]{1,0:T(1,128)}', space=vmem, size = 0x12000, scoped, tag = 'internal scratch']
  #allocation2 [shape = 'f32[8,128]{1,0:T(8,128)}', space=vmem, size = 0x1000, scoped, tag = 'scratch operand']
  #allocation3 [shape = 'f32[8,128]{1,0:T(8,128)}', space=vmem, size = 0x1000, scoped, tag = 'scratch operand']
  %s0 = inlined_call_operand.hbm [shape: f32[16,128], index: 0, kind: input, shape index: {}]
  %s1 = inlined_call_operand.vmem [shape: f32[1,128], index: 1, kind: input, shape index: {}]
  %s2 = inlined_call_operand.vmem [shape: f32[1,128], index: 2, kind: input, shape index: {}]
  %s3 = inlined_call_operand.hbm [shape: f32[128,128], index: 3, kind: input, shape index: {}]
  %s4 = inlined_call_operand.vmem [shape: f32[1,128], index: 4, kind: input, shape index: {}]
  %s5 = inlined_call_operand.hbm [shape: f32[128,128], index: 5, kind: input, shape index: {}]
  %s6 = inlined_call_operand.vmem [shape: f32[1,128], index: 6, kind: input, shape index: {}]
  %s7 = inlined_call_operand.hbm [shape: f32[16,128], index: 7, kind: output, shape index: {}]
  %s8 = sld [smem:[#allocation0]]
  $region81: #{tpu_custom_call.1} parent=0
    _
  %s10 = ssub.s32 1, %s8
  %s11 = scalar_select 0, %s10, %s8
  $region1: #{tpu_custom_call.1} parent=0
    #allocation4 [shape = 'u8[8192]{0}', space=vmem, size = 0x2000, scoped, tag = 'input window, operand 0']
    #allocation5 [shape = 's32[2]{0}', space=sflag, size = 0x8, scoped, tag = 'scoped memory for tpu_custom_call.1']
    #allocation6 [shape = 's32[2]{0}', space=sflag, size = 0x8, scoped, tag = 'scoped memory for tpu_custom_call.1']
    #allocation7 [shape = 'u8[65536]{0}', space=vmem, size = 0x10000, scoped, tag = 'input window, operand 3, single buffered']
    #allocation8 [shape = 's32[1]{0}', space=sflag, size = 0x4, scoped, tag = 'scoped memory for tpu_custom_call.1']
    #allocation9 [shape = 'u8[65536]{0}', space=vmem, size = 0x10000, scoped, tag = 'input window, operand 5, single buffered']
    #allocation10 [shape = 'u8[8192]{0}', space=vmem, size = 0x2000, scoped, tag = 'output window, operand 0']
    %12 = vsyncpa [#allocation5], 0
    %s13 = scalar_lea.sflag [#allocation5], 1
    %14 = vsyncpa %s13, 0
    %15 = vsyncpa [#allocation8], 0
    %16 = vsyncpa [#allocation6], 0
    %s17 = scalar_lea.sflag [#allocation6], 1
    %18 = vsyncpa %s17, 0
    loop: start=0, step=1, limit=4
    $region2: #{tpu_custom_call.1} parent=1 // loop_pre_header
      _
    $region3: #{tpu_custom_call.1} parent=1 // loop_header
      %s20 = sphi 0, %s24
      %p21 = scmp.ge.s32.totalorder %s20, 4
      %s27 = sphi 0, %s39
      %s28 = sphi 0, %s35
      %s29 = sphi 0, %s27
      %s30 = sphi 0, %s28
      %s31 = sphi 0, %s29
      %s32 = sphi 0, %s30
      %s42 = sphi 0, %s44
      %s45 = sphi 0, %s42
      %s46 = sphi 0, %s45
      %s62 = sphi 0, %s46
      %s66 = sphi 0, %s66
      %s68 = sphi 0, %s66
      %s69 = sphi 0, %s68
      %s83 = sphi 0, %s69
      %s87 = sphi 0, %s87
      %s89 = sphi 0, %s87
      %s90 = sphi 0, %s89
      %s104 = sphi 0, %s90
      %s110 = sphi 0, %s112
      %s113 = sphi 0, %s110
      %s114 = sphi 0, %s113
      %s130 = sphi 0, %s114
      %s136 = sphi 0, %s138
      %s139 = sphi 0, %s136
      %s140 = sphi 0, %s139
      %s156 = sphi 0, %s140
      %s162 = sphi 0, %s164
      %s165 = sphi 0, %s162
      %s166 = sphi 0, %s165
      %s182 = sphi 0, %s166
      %s186 = sphi 0, %s186
      %s188 = sphi 0, %s186
      %s189 = sphi 0, %s188
      %s203 = sphi 0, %s189
      %s209 = sphi 0, %s211
      %s212 = sphi 0, %s209
      %s213 = sphi 0, %s212
      %s229 = sphi 0, %s213
    $region4: #{tpu_custom_call.1} parent=1 // loop_header_branch
      %23 = sbr.rel (%p21) target = $region8
    $region5: #{tpu_custom_call.1} parent=1 // loop_body
      %s25 = ssub.s32 %s20, 1
      %s26 = ssub.s32 %s20, 2
      %s33 = sadd.s32 1, %s28
      %p34 = scmp.ge.s32.totalorder %s33, 1
      %s35 = scalar_select %p34, 0, %s33
      %s36 = sadd.s32 1, %s27
      %s37 = scalar_select %p34, %s36, %s27
      %p38 = scmp.ge.s32.totalorder %s37, 2
      %s39 = scalar_select %p38, 0, %s37
      %s40 = ssub.s32 %s27, %s39
      %p41 = scmp.eq.s32.totalorder %s40, 0
      %s43 = sadd.s32 %s42, 1
      %s44 = scalar_select %p41, %s42, %s43
      %p47 = pneg %p41
      %p48 = scmp.eq.s32.totalorder %s20, 1
      %p49 = por %p47, %p48
      %p50 = scmp.ne.s32.totalorder %s42, %s45
      %p51 = scmp.eq.s32.totalorder %s20, 0
      %p52 = por %p50, %p51
      %p53 = scmp.ne.s32.totalorder %s42, %s45
      %p54 = scmp.eq.s32.totalorder %s25, 1
      %p55 = por %p53, %p54
      %p56 = scmp.ne.s32.totalorder %s45, %s46
      %p57 = scmp.eq.s32.totalorder %s25, 0
      %p58 = por %p56, %p57
      %p59 = scmp.ne.s32.totalorder %s45, %s46
      %p60 = scmp.eq.s32.totalorder %s26, 1
      %p61 = por %p59, %p60
      %p63 = scmp.ne.s32.totalorder %s46, %s62
      %p64 = scmp.eq.s32.totalorder %s26, 0
      %p65 = por %p63, %p64
      %s67 = sadd.s32 %s66, 1
      %p70 = scmp.eq.s32.totalorder %s20, 1
      %p71 = scmp.ne.s32.totalorder %s66, %s68
      %p72 = scmp.eq.s32.totalorder %s20, 0
      %p73 = por %p71, %p72
      %p74 = scmp.ne.s32.totalorder %s66, %s68
      %p75 = scmp.eq.s32.totalorder %s25, 1
      %p76 = por %p74, %p75
      %p77 = scmp.ne.s32.totalorder %s68, %s69
      %p78 = scmp.eq.s32.totalorder %s25, 0
      %p79 = por %p77, %p78
      %p80 = scmp.ne.s32.totalorder %s68, %s69
      %p81 = scmp.eq.s32.totalorder %s26, 1
      %p82 = por %p80, %p81
      %p84 = scmp.ne.s32.totalorder %s69, %s83
      %p85 = scmp.eq.s32.totalorder %s26, 0
      %p86 = por %p84, %p85
      %s88 = sadd.s32 %s87, 1
      %p91 = scmp.eq.s32.totalorder %s20, 1
      %p92 = scmp.ne.s32.totalorder %s87, %s89
      %p93 = scmp.eq.s32.totalorder %s20, 0
      %p94 = por %p92, %p93
      %p95 = scmp.ne.s32.totalorder %s87, %s89
      %p96 = scmp.eq.s32.totalorder %s25, 1
      %p97 = por %p95, %p96
      %p98 = scmp.ne.s32.totalorder %s89, %s90
      %p99 = scmp.eq.s32.totalorder %s25, 0
      %p100 = por %p98, %p99
      %p101 = scmp.ne.s32.totalorder %s89, %s90
      %p102 = scmp.eq.s32.totalorder %s26, 1
      %p103 = por %p101, %p102
      %p105 = scmp.ne.s32.totalorder %s90, %s104
      %p106 = scmp.eq.s32.totalorder %s26, 0
      %p107 = por %p105, %p106
      %s108 = ssub.s32 %s28, %s35
      %p109 = scmp.eq.s32.totalorder %s108, 0
      %s111 = sadd.s32 %s110, 1
      %s112 = scalar_select %p109, %s110, %s111
      %p115 = pneg %p109
      %p116 = scmp.eq.s32.totalorder %s20, 1
      %p117 = por %p115, %p116
      %p118 = scmp.ne.s32.totalorder %s110, %s113
      %p119 = scmp.eq.s32.totalorder %s20, 0
      %p120 = por %p118, %p119
      %p121 = scmp.ne.s32.totalorder %s110, %s113
      %p122 = scmp.eq.s32.totalorder %s25, 1
      %p123 = por %p121, %p122
      %p124 = scmp.ne.s32.totalorder %s113, %s114
      %p125 = scmp.eq.s32.totalorder %s25, 0
      %p126 = por %p124, %p125
      %p127 = scmp.ne.s32.totalorder %s113, %s114
      %p128 = scmp.eq.s32.totalorder %s26, 1
      %p129 = por %p127, %p128
      %p131 = scmp.ne.s32.totalorder %s114, %s130
      %p132 = scmp.eq.s32.totalorder %s26, 0
      %p133 = por %p131, %p132
      %s134 = ssub.s32 %s28, %s35
      %p135 = scmp.eq.s32.totalorder %s134, 0
      %s137 = sadd.s32 %s136, 1
      %s138 = scalar_select %p135, %s136, %s137
      %p141 = pneg %p135
      %p142 = scmp.eq.s32.totalorder %s20, 1
      %p143 = por %p141, %p142
      %p144 = scmp.ne.s32.totalorder %s136, %s139
      %p145 = scmp.eq.s32.totalorder %s20, 0
      %p146 = por %p144, %p145
      %p147 = scmp.ne.s32.totalorder %s136, %s139
      %p148 = scmp.eq.s32.totalorder %s25, 1
      %p149 = por %p147, %p148
      %p150 = scmp.ne.s32.totalorder %s139, %s140
      %p151 = scmp.eq.s32.totalorder %s25, 0
      %p152 = por %p150, %p151
      %p153 = scmp.ne.s32.totalorder %s139, %s140
      %p154 = scmp.eq.s32.totalorder %s26, 1
      %p155 = por %p153, %p154
      %p157 = scmp.ne.s32.totalorder %s140, %s156
      %p158 = scmp.eq.s32.totalorder %s26, 0
      %p159 = por %p157, %p158
      %s160 = ssub.s32 %s28, %s35
      %p161 = scmp.eq.s32.totalorder %s160, 0
      %s163 = sadd.s32 %s162, 1
      %s164 = scalar_select %p161, %s162, %s163
      %p167 = pneg %p161
      %p168 = scmp.eq.s32.totalorder %s20, 1
      %p169 = por %p167, %p168
      %p170 = scmp.ne.s32.totalorder %s162, %s165
      %p171 = scmp.eq.s32.totalorder %s20, 0
      %p172 = por %p170, %p171
      %p173 = scmp.ne.s32.totalorder %s162, %s165
      %p174 = scmp.eq.s32.totalorder %s25, 1
      %p175 = por %p173, %p174
      %p176 = scmp.ne.s32.totalorder %s165, %s166
      %p177 = scmp.eq.s32.totalorder %s25, 0
      %p178 = por %p176, %p177
      %p179 = scmp.ne.s32.totalorder %s165, %s166
      %p180 = scmp.eq.s32.totalorder %s26, 1
      %p181 = por %p179, %p180
      %p183 = scmp.ne.s32.totalorder %s166, %s182
      %p184 = scmp.eq.s32.totalorder %s26, 0
      %p185 = por %p183, %p184
      %s187 = sadd.s32 %s186, 1
      %p190 = scmp.eq.s32.totalorder %s20, 1
      %p191 = scmp.ne.s32.totalorder %s186, %s188
      %p192 = scmp.eq.s32.totalorder %s20, 0
      %p193 = por %p191, %p192
      %p194 = scmp.ne.s32.totalorder %s186, %s188
      %p195 = scmp.eq.s32.totalorder %s25, 1
      %p196 = por %p194, %p195
      %p197 = scmp.ne.s32.totalorder %s188, %s189
      %p198 = scmp.eq.s32.totalorder %s25, 0
      %p199 = por %p197, %p198
      %p200 = scmp.ne.s32.totalorder %s188, %s189
      %p201 = scmp.eq.s32.totalorder %s26, 1
      %p202 = por %p200, %p201
      %p204 = scmp.ne.s32.totalorder %s189, %s203
      %p205 = scmp.eq.s32.totalorder %s26, 0
      %p206 = por %p204, %p205
      %s207 = ssub.s32 %s27, %s39
      %p208 = scmp.eq.s32.totalorder %s207, 0
      %s210 = sadd.s32 %s209, 1
      %s211 = scalar_select %p208, %s209, %s210
      %p214 = pneg %p208
      %p215 = scmp.eq.s32.totalorder %s20, 1
      %p216 = por %p214, %p215
      %p217 = scmp.ne.s32.totalorder %s209, %s212
      %p218 = scmp.eq.s32.totalorder %s20, 0
      %p219 = por %p217, %p218
      %p220 = scmp.ne.s32.totalorder %s209, %s212
      %p221 = scmp.eq.s32.totalorder %s25, 1
      %p222 = por %p220, %p221
      %p223 = scmp.ne.s32.totalorder %s212, %s213
      %p224 = scmp.eq.s32.totalorder %s25, 0
      %p225 = por %p223, %p224
      %p226 = scmp.ne.s32.totalorder %s212, %s213
      %p227 = scmp.eq.s32.totalorder %s26, 1
      %p228 = por %p226, %p227
      %p230 = scmp.ne.s32.totalorder %s213, %s229
      %p231 = scmp.eq.s32.totalorder %s26, 0
      %p232 = por %p230, %p231
      %p233 = scmp.le.s32.totalorder 1, %s20
      %p234 = scmp.lt.s32.totalorder %s20, 3
      %p235 = pnand %p233, %p234
      %p236 = pneg %p235
      // Predicated region
      $region9: #{tpu_custom_call.1} parent=5 // pred_check
        _
      $region10: #{tpu_custom_call.1} parent=5 // pred_check_branch
        %238 = sbr.rel (%p235) target = $region12
      $region11: #{tpu_custom_call.1} parent=5 // pred_region
        %s239 = ssub.s32 %s20, 1
        // Predicated region
        $region13: #{tpu_custom_call.1} parent=11 // pred_check
          %p240 = pneg %p79
        $region14: #{tpu_custom_call.1} parent=11 // pred_check_branch
          %242 = sbr.rel (%p240) target = $region16
        $region15: #{tpu_custom_call.1} parent=11 // pred_region
          _
        $region16: #{tpu_custom_call.1} parent=11 // pred_fallthru
          _
        // Predicated region
        $region17: #{tpu_custom_call.1} parent=11 // pred_check
          %p243 = pneg %p100
        $region18: #{tpu_custom_call.1} parent=11 // pred_check_branch
          %245 = sbr.rel (%p243) target = $region20
        $region19: #{tpu_custom_call.1} parent=11 // pred_region
          _
        $region20: #{tpu_custom_call.1} parent=11 // pred_fallthru
          _
        // Predicated region
        $region21: #{tpu_custom_call.1} parent=11 // pred_check
          %p246 = pneg %p126
        $region22: #{tpu_custom_call.1} parent=11 // pred_check_branch
          %248 = sbr.rel (%p246) target = $region24
        $region23: #{tpu_custom_call.1} parent=11 // pred_region
          %s250 = ssub.s32 2048, 2048
          %251 = vsyncadd [#allocation8], %s250
          %s252 = smul.addr %s30, 128
          %s253 = scalar_lea.hbm %s3, %s252
          %s254 = sshll.u32 [#allocation7], 4
          %s255 = int_to_ptr.vmem [resolvable:$true] %s254
          %260 = dma.hbm_to_vmem [thread:$0]  %s253, 2048, %s255, [#allocation8], 128, 128, 8
        $region24: #{tpu_custom_call.1} parent=11 // pred_fallthru
          _
        // Predicated region
        $region25: #{tpu_custom_call.1} parent=11 // pred_check
          %p261 = pneg %p152
        $region26: #{tpu_custom_call.1} parent=11 // pred_check_branch
          %263 = sbr.rel (%p261) target = $region28
        $region27: #{tpu_custom_call.1} parent=11 // pred_region
          %p264 = scmp.lt.s32.totalorder %s30, 0
          %s265 = scalar_select %p264, %s30, 0
          %s266 = scalar_lea.vmem %s4, %s265
        $region28: #{tpu_custom_call.1} parent=11 // pred_fallthru
          _
        // Predicated region
        $region29: #{tpu_custom_call.1} parent=11 // pred_check
          %p267 = pneg %p178
        $region30: #{tpu_custom_call.1} parent=11 // pred_check_branch
          %269 = sbr.rel (%p267) target = $region32
        $region31: #{tpu_custom_call.1} parent=11 // pred_region
          %s270 = smul.u32 16, %s30
          %s272 = ssub.s32 2048, 2048
          %273 = vsyncadd [#allocation8], %s272
          %s274 = smul.addr %s270, 128
          %s275 = scalar_lea.hbm %s5, %s274
          %s276 = sshll.u32 [#allocation9], 4
          %s277 = int_to_ptr.vmem [resolvable:$true] %s276
          %282 = dma.hbm_to_vmem [thread:$0]  %s275, 2048, %s277, [#allocation8], 128, 128, 8
        $region32: #{tpu_custom_call.1} parent=11 // pred_fallthru
          _
        // Predicated region
        $region33: #{tpu_custom_call.1} parent=11 // pred_check
          %p283 = pneg %p199
        $region34: #{tpu_custom_call.1} parent=11 // pred_check_branch
          %285 = sbr.rel (%p283) target = $region36
        $region35: #{tpu_custom_call.1} parent=11 // pred_region
          _
        $region36: #{tpu_custom_call.1} parent=11 // pred_fallthru
          _
      $region12: #{tpu_custom_call.1} parent=5 // pred_fallthru
        _
      %p286 = scmp.lt.s32.totalorder %s20, 2
      // Predicated region
      $region37: #{tpu_custom_call.1} parent=5 // pred_check
        %p287 = pneg %p286
      $region38: #{tpu_custom_call.1} parent=5 // pred_check_branch
        %289 = sbr.rel (%p287) target = $region40
      $region39: #{tpu_custom_call.1} parent=5 // pred_region
        // Predicated region
        $region41: #{tpu_custom_call.1} parent=39 // pred_check
          %p290 = pneg %p52
        $region42: #{tpu_custom_call.1} parent=39 // pred_check_branch
          %292 = sbr.rel (%p290) target = $region44
        $region43: #{tpu_custom_call.1} parent=39 // pred_region
          %s293 = sand.u32 %s42, 1
          %s294 = scalar_lea.sflag [#allocation5], %s293
          %s295 = sand.u32 %s42, 1
          %s296 = smul.addr %s295, 8
          %s297 = scalar_lea.vmem [#allocation4], %s296
          %s299 = ssub.s32 128, 128
          %300 = vsyncadd %s294, %s299
          %s301 = smul.addr %s27, 128
          %s302 = scalar_lea.hbm %s0, %s301
          %s304 = sshll.u32 %s297, 4
          %s305 = int_to_ptr.vmem [resolvable:$true] %s304
          %307 = dma.hbm_to_vmem [thread:$0]  %s302, 128, %s305, %s294
        $region44: #{tpu_custom_call.1} parent=39 // pred_fallthru
          _
      $region40: #{tpu_custom_call.1} parent=5 // pred_fallthru
        _
      %p308 = scmp.le.s32.totalorder 1, %s20
      %p309 = scmp.lt.s32.totalorder %s20, 3
      %p310 = pnand %p308, %p309
      %p311 = pneg %p310
      // Predicated region
      $region45: #{tpu_custom_call.1} parent=5 // pred_check
        _
      $region46: #{tpu_custom_call.1} parent=5 // pred_check_branch
        %313 = sbr.rel (%p310) target = $region48
      $region47: #{tpu_custom_call.1} parent=5 // pred_region
        %s314 = ssub.s32 %s20, 1
        %s315 = sand.u32 %s45, 1
        %s316 = scalar_lea.sflag [#allocation5], %s315
        %s317 = sand.u32 %s45, 1
        %s318 = smul.addr %s317, 8
        %s319 = scalar_lea.vmem [#allocation4], %s318
        // Predicated region
        $region49: #{tpu_custom_call.1} parent=47 // pred_check
          %p320 = pneg %p58
        $region50: #{tpu_custom_call.1} parent=47 // pred_check_branch
          %322 = sbr.rel (%p320) target = $region52
        $region51: #{tpu_custom_call.1} parent=47 // pred_region
          %323 = dma.done %s316, 128
        $region52: #{tpu_custom_call.1} parent=47 // pred_fallthru
          _
        // Predicated region
        $region53: #{tpu_custom_call.1} parent=47 // pred_check
          %p324 = pneg %p126
        $region54: #{tpu_custom_call.1} parent=47 // pred_check_branch
          %326 = sbr.rel (%p324) target = $region56
        $region55: #{tpu_custom_call.1} parent=47 // pred_region
          %327 = dma.done [#allocation8], 2048
        $region56: #{tpu_custom_call.1} parent=47 // pred_fallthru
          _
        // Predicated region
        $region57: #{tpu_custom_call.1} parent=47 // pred_check
          %p328 = pneg %p178
        $region58: #{tpu_custom_call.1} parent=47 // pred_check_branch
          %330 = sbr.rel (%p328) target = $region60
        $region59: #{tpu_custom_call.1} parent=47 // pred_region
          %331 = dma.done [#allocation8], 2048
        $region60: #{tpu_custom_call.1} parent=47 // pred_fallthru
          _
        %s332 = sand.u32 %s45, 1
        %s333 = scalar_lea.sflag [#allocation5], %s332
        %s334 = sand.u32 %s45, 1
        %s335 = smul.addr %s334, 8
        %s336 = scalar_lea.vmem [#allocation4], %s335
        %p337 = pneg %p58
        %p338 = pneg %p55
        %p339 = pneg %p79
        %p340 = pneg %p76
        %p341 = pneg %p100
        %p342 = pneg %p97
        %p343 = pneg %p126
        %p344 = pneg %p123
        %p345 = scmp.lt.s32.totalorder %s30, 0
        %s346 = scalar_select %p345, %s30, 0
        %s347 = scalar_lea.vmem %s4, %s346
        %p348 = pneg %p152
        %p349 = pneg %p149
        %p350 = pneg %p178
        %p351 = pneg %p175
        %p352 = pneg %p199
        %p353 = pneg %p196
        %p354 = pneg %p225
        %p355 = pneg %p222
        %s356 = sand.u32 %s212, 1
        %s357 = scalar_lea.sflag [#allocation6], %s356
        %s358 = sand.u32 %s212, 1
        %s359 = smul.addr %s358, 8
        %s360 = scalar_lea.vmem [#allocation10], %s359
        %p361 = scmp.lt.s32.totalorder %s30, 0
        %s362 = scalar_select %p361, %s30, 0
        %s363 = scalar_lea.vmem %s4, %s362
        %s364 = smul.u32 16, %s30
        %p365 = scmp.eq.s32.totalorder %s30, 0
        // Predicated region
        $region61: #{tpu_custom_call.1} parent=47 // pred_check
          %p366 = pneg %p365
        $region62: #{tpu_custom_call.1} parent=47 // pred_check_branch
          %368 = sbr.rel (%p366) target = $region64
        $region63: #{tpu_custom_call.1} parent=47 // pred_region
          %v369 = vld [vmem:[%s319] sm:$0xff]
          %370 = vadd.xlane.f32.xlu0 %v369
          %v371 = vpop.xlane.xlu0 %370
          %v372 = vmul.f32 %v371, 0.03125
          %v373 = vsub.f32 %v369, %v372
          %v374 = vlaneseq
          %v375 = vand.u32 %v374, 127
          %vm376 = vcmp.lt.s32.totalorder %v375, 32
          %v377 = vsel %vm376, 1, 0
          %vm378 = vcmp.eq.s32.totalorder %v377, 1
          %v379 = vsel %vm378, %v373, 0.0
          %v380 = vmul.f32 %v379, %v379
          %381 = vadd.xlane.f32.xlu0 %v380
          %v382 = vpop.xlane.xlu0 %381
          %v383 = vmul.f32 %v382, 0.03125
          %v384 = vadd.f32 %v383, 1e-05
          %v385 = vrsqrt.pop %v384
          %v386 = vmul.f32 %v379, %v385
          %v387 = vld [vmem:[%s1] sm:$0x1]
          %v389 = vlaneseq
          %v390 = vshrl.u32 %v389, 7
          %v391 = vsub.s32 0, %v390
          %v392 = vrot.slane %v387, %v391
          %v394 = vmul.f32 %v386, %v392
          %v395 = vld [vmem:[%s2] sm:$0x1]
          %v397 = vlaneseq
          %v398 = vshrl.u32 %v397, 7
          %v399 = vsub.s32 0, %v398
          %v400 = vrot.slane %v395, %v399
          %v402 = vadd.f32 %v394, %v400
          %403 = vst [vmem:[#allocation2] sm:$0xff] %v402
          %404 = vst [vmem:[#allocation3] sm:$0xff] 0.0
        $region64: #{tpu_custom_call.1} parent=47 // pred_fallthru
          _
        %v405 = vld [vmem:[#allocation2] sm:$0xff]
        %v406 = vld [vmem:[#allocation7] sm:$0xff]
        %v407 = vld [vmem:[#allocation7 + $0x8] sm:$0xff]
        %v408 = vld [vmem:[#allocation7 + $0x10] sm:$0xff]
        %v409 = vld [vmem:[#allocation7 + $0x18] sm:$0xff]
        %v410 = vld [vmem:[#allocation7 + $0x20] sm:$0xff]
        %v411 = vld [vmem:[#allocation7 + $0x28] sm:$0xff]
        %v412 = vld [vmem:[#allocation7 + $0x30] sm:$0xff]
        %v413 = vld [vmem:[#allocation7 + $0x38] sm:$0xff]
        %v414 = vld [vmem:[#allocation7 + $0x40] sm:$0xff]
        %v415 = vld [vmem:[#allocation7 + $0x48] sm:$0xff]
        %v416 = vld [vmem:[#allocation7 + $0x50] sm:$0xff]
        %v417 = vld [vmem:[#allocation7 + $0x58] sm:$0xff]
        %v418 = vld [vmem:[#allocation7 + $0x60] sm:$0xff]
        %v419 = vld [vmem:[#allocation7 + $0x68] sm:$0xff]
        %v420 = vld [vmem:[#allocation7 + $0x70] sm:$0xff]
        %v421 = vld [vmem:[#allocation7 + $0x78] sm:$0xff]
        %v422 = vld [vmem:[%s363] sm:$0x1]
        %v424 = vlaneseq
        %v425 = vshrl.u32 %v424, 7
        %v426 = vsub.s32 0, %v425
        %v427 = vrot.slane %v422, %v426
        %429 = vmatprep.subr.mxu0 0.0
        %430 = vmatpush1.msra.mxu0 %v406
        %431 = vmatprep.subr.mxu0 0.0
        %432 = vmatpush1.msra.mxu0 %v407
        %433 = vmatprep.subr.mxu0 0.0
        %434 = vmatpush1.msra.mxu0 %v408
        %435 = vmatprep.subr.mxu0 0.0
        %436 = vmatpush1.msra.mxu0 %v409
        %437 = vmatprep.subr.mxu0 0.0
        %438 = vmatpush1.msra.mxu0 %v410
        %439 = vmatprep.subr.mxu0 0.0
        %440 = vmatpush1.msra.mxu0 %v411
        %441 = vmatprep.subr.mxu0 0.0
        %442 = vmatpush1.msra.mxu0 %v412
        %443 = vmatprep.subr.mxu0 0.0
        %444 = vmatpush1.msra.mxu0 %v413
        %445 = vmatprep.subr.mxu0 0.0
        %446 = vmatpush1.msra.mxu0 %v414
        %447 = vmatprep.subr.mxu0 0.0
        %448 = vmatpush1.msra.mxu0 %v415
        %449 = vmatprep.subr.mxu0 0.0
        %450 = vmatpush1.msra.mxu0 %v416
        %451 = vmatprep.subr.mxu0 0.0
        %452 = vmatpush1.msra.mxu0 %v417
        %453 = vmatprep.subr.mxu0 0.0
        %454 = vmatpush1.msra.mxu0 %v418
        %455 = vmatprep.subr.mxu0 0.0
        %456 = vmatpush1.msra.mxu0 %v419
        %457 = vmatprep.subr.mxu0 0.0
        %458 = vmatpush1.msra.mxu0 %v420
        %459 = vmatprep.subr.mxu0 0.0
        %460 = vmatpush1.msra.mxu0 %v421
        %461 = vmatprep.subr.mxu0 0.0
        %462 = vmatpush1.msra.mxu0 0.0
        %463 = vmatprep.subr.mxu0 0.0
        %464 = vmatpush1.msra.mxu0 0.0
        %465 = vmatprep.subr.mxu0 0.0
        %466 = vmatpush1.msra.mxu0 0.0
        %467 = vmatprep.subr.mxu0 0.0
        %468 = vmatpush1.msra.mxu0 0.0
        %469 = vmatprep.subr.mxu0 0.0
        %470 = vmatpush1.msra.mxu0 0.0
        %471 = vmatprep.subr.mxu0 0.0
        %472 = vmatpush1.msra.mxu0 0.0
        %473 = vmatprep.subr.mxu0 0.0
        %474 = vmatpush1.msra.mxu0 0.0
        %475 = vmatprep.subr.mxu0 0.0
        %476 = vmatpush1.msra.mxu0 0.0
        %477 = vmatprep.subr.mxu0 0.0
        %478 = vmatpush1.msra.mxu0 0.0
        %479 = vmatprep.subr.mxu0 0.0
        %480 = vmatpush1.msra.mxu0 0.0
        %481 = vmatprep.subr.mxu0 0.0
        %482 = vmatpush1.msra.mxu0 0.0
        %483 = vmatprep.subr.mxu0 0.0
        %484 = vmatpush1.msra.mxu0 0.0
        %485 = vmatprep.subr.mxu0 0.0
        %486 = vmatpush1.msra.mxu0 0.0
        %487 = vmatprep.subr.mxu0 0.0
        %488 = vmatpush1.msra.mxu0 0.0
        %489 = vmatprep.subr.mxu0 0.0
        %490 = vmatpush1.msra.mxu0 0.0
        %491 = vmatprep.subr.mxu0 0.0
        %492 = vmatpush1.msra.mxu0 0.0
        %493 = vmatprep.mubr.f32.mxu0 0.0
        %494 = vmatmul.mubr.f32.gmra.mrb[0].mxu0 %v405
        %v495 = vpop.f32.mrb[0].mxu0
        %v496 = vadd.f32 %v427, %v495
        %v497 = vpop.f32.mrb[0].mxu0
        %498 = vdwg.mxu0
        %v499 = vmul.f32 %v496, 0.5
        %v500 = vmul.f32 %v496, 0.70710677
        %v501 = vand.u32 2147483647, %v500
        %v502 = vmul.f32 %v501, 0.3275911
        %v503 = vadd.f32 %v502, 1.0
        %v504 = vrcp.pop %v503
        %v505 = vmul.f32 1.0, %v504
        %v506 = vmul.f32 %v505, 1.0614054
        %v507 = vadd.f32 %v506, -1.4531521
        %v508 = vmul.f32 %v507, %v505
        %v509 = vadd.f32 %v508, 1.4214138
        %v510 = vmul.f32 %v509, %v505
        %v511 = vadd.f32 %v510, -0.28449672
        %v512 = vmul.f32 %v511, %v505
        %v513 = vadd.f32 %v512, 0.2548296
        %v514 = vmul.f32 %v513, %v505
        %v515 = vsub.f32 0.0, %v501
        %v516 = vmul.f32 %v515, %v501
        %v517 = vmul.f32 %v516, 1.442695
        %v518 = vpow.pop %v517
        %v519 = vmul.f32 %v514, %v518
        %v520 = vsub.f32 1.0, %v519
        %vm521 = vcmp.ge.f32.partialorder %v500, 0.0
        %v522 = vsub.f32 0.0, %v520
        %v523 = vsel %vm521, %v520, %v522
        %v524 = vadd.f32 %v523, 1.0
        %v525 = vmul.f32 %v499, %v524
        %v526 = vld [vmem:[#allocation3] sm:$0xff]
        %v527 = vld [vmem:[#allocation9] sm:$0xff]
        %v528 = vld [vmem:[#allocation9 + $0x8] sm:$0xff]
        %v529 = vld [vmem:[#allocation9 + $0x10] sm:$0xff]
        %v530 = vld [vmem:[#allocation9 + $0x18] sm:$0xff]
        %v531 = vld [vmem:[#allocation9 + $0x20] sm:$0xff]
        %v532 = vld [vmem:[#allocation9 + $0x28] sm:$0xff]
        %v533 = vld [vmem:[#allocation9 + $0x30] sm:$0xff]
        %v534 = vld [vmem:[#allocation9 + $0x38] sm:$0xff]
        %v535 = vld [vmem:[#allocation9 + $0x40] sm:$0xff]
        %v536 = vld [vmem:[#allocation9 + $0x48] sm:$0xff]
        %v537 = vld [vmem:[#allocation9 + $0x50] sm:$0xff]
        %v538 = vld [vmem:[#allocation9 + $0x58] sm:$0xff]
        %v539 = vld [vmem:[#allocation9 + $0x60] sm:$0xff]
        %v540 = vld [vmem:[#allocation9 + $0x68] sm:$0xff]
        %v541 = vld [vmem:[#allocation9 + $0x70] sm:$0xff]
        %v542 = vld [vmem:[#allocation9 + $0x78] sm:$0xff]
        %543 = vmatprep.subr.mxu0 0.0
        %544 = vmatpush1.msra.mxu0 %v527
        %545 = vmatprep.subr.mxu0 0.0
        %546 = vmatpush1.msra.mxu0 %v528
        %547 = vmatprep.subr.mxu0 0.0
        %548 = vmatpush1.msra.mxu0 %v529
        %549 = vmatprep.subr.mxu0 0.0
        %550 = vmatpush1.msra.mxu0 %v530
        %551 = vmatprep.subr.mxu0 0.0
        %552 = vmatpush1.msra.mxu0 %v531
        %553 = vmatprep.subr.mxu0 0.0
        %554 = vmatpush1.msra.mxu0 %v532
        %555 = vmatprep.subr.mxu0 0.0
        %556 = vmatpush1.msra.mxu0 %v533
        %557 = vmatprep.subr.mxu0 0.0
        %558 = vmatpush1.msra.mxu0 %v534
        %559 = vmatprep.subr.mxu0 0.0
        %560 = vmatpush1.msra.mxu0 %v535
        %561 = vmatprep.subr.mxu0 0.0
        %562 = vmatpush1.msra.mxu0 %v536
        %563 = vmatprep.subr.mxu0 0.0
        %564 = vmatpush1.msra.mxu0 %v537
        %565 = vmatprep.subr.mxu0 0.0
        %566 = vmatpush1.msra.mxu0 %v538
        %567 = vmatprep.subr.mxu0 0.0
        %568 = vmatpush1.msra.mxu0 %v539
        %569 = vmatprep.subr.mxu0 0.0
        %570 = vmatpush1.msra.mxu0 %v540
        %571 = vmatprep.subr.mxu0 0.0
        %572 = vmatpush1.msra.mxu0 %v541
        %573 = vmatprep.subr.mxu0 0.0
        %574 = vmatpush1.msra.mxu0 %v542
        %575 = vmatprep.subr.mxu0 0.0
        %576 = vmatpush1.msra.mxu0 0.0
        %577 = vmatprep.subr.mxu0 0.0
        %578 = vmatpush1.msra.mxu0 0.0
        %579 = vmatprep.subr.mxu0 0.0
        %580 = vmatpush1.msra.mxu0 0.0
        %581 = vmatprep.subr.mxu0 0.0
        %582 = vmatpush1.msra.mxu0 0.0
        %583 = vmatprep.subr.mxu0 0.0
        %584 = vmatpush1.msra.mxu0 0.0
        %585 = vmatprep.subr.mxu0 0.0
        %586 = vmatpush1.msra.mxu0 0.0
        %587 = vmatprep.subr.mxu0 0.0
        %588 = vmatpush1.msra.mxu0 0.0
        %589 = vmatprep.subr.mxu0 0.0
        %590 = vmatpush1.msra.mxu0 0.0
        %591 = vmatprep.subr.mxu0 0.0
        %592 = vmatpush1.msra.mxu0 0.0
        %593 = vmatprep.subr.mxu0 0.0
        %594 = vmatpush1.msra.mxu0 0.0
        %595 = vmatprep.subr.mxu0 0.0
        %596 = vmatpush1.msra.mxu0 0.0
        %597 = vmatprep.subr.mxu0 0.0
        %598 = vmatpush1.msra.mxu0 0.0
        %599 = vmatprep.subr.mxu0 0.0
        %600 = vmatpush1.msra.mxu0 0.0
        %601 = vmatprep.subr.mxu0 0.0
        %602 = vmatpush1.msra.mxu0 0.0
        %603 = vmatprep.subr.mxu0 0.0
        %604 = vmatpush1.msra.mxu0 0.0
        %605 = vmatprep.subr.mxu0 0.0
        %606 = vmatpush1.msra.mxu0 0.0
        %607 = vmatprep.mubr.f32.mxu0 0.0
        %608 = vmatmul.mubr.f32.gmra.mrb[0].mxu0 %v525
        %v609 = vpop.f32.mrb[0].mxu0
        %v610 = vadd.f32 0.0, %v609
        %v611 = vpop.f32.mrb[0].mxu0
        %612 = vdwg.mxu0
        %v613 = vadd.f32 %v526, %v610
        %614 = vst [vmem:[#allocation3] sm:$0xff] %v613
        // Predicated region
        $region65: #{tpu_custom_call.1} parent=47 // pred_check
          %p615 = pneg %p365
        $region66: #{tpu_custom_call.1} parent=47 // pred_check_branch
          %617 = sbr.rel (%p615) target = $region68
        $region67: #{tpu_custom_call.1} parent=47 // pred_region
          %v618 = vld [vmem:[#allocation3] sm:$0xff]
          %v619 = vld [vmem:[%s6] sm:$0x1]
          %v621 = vlaneseq
          %v622 = vshrl.u32 %v621, 7
          %v623 = vsub.s32 0, %v622
          %v624 = vrot.slane %v619, %v623
          %v626 = vadd.f32 %v618, %v624
          %627 = vst [vmem:[%s360] sm:$0xff] %v626
        $region68: #{tpu_custom_call.1} parent=47 // pred_fallthru
          _
        %s628 = sand.u32 %s212, 1
        %s629 = scalar_lea.sflag [#allocation6], %s628
        %s630 = sand.u32 %s212, 1
        %s631 = smul.addr %s630, 8
        %s632 = scalar_lea.vmem [#allocation10], %s631
        // Predicated region
        $region69: #{tpu_custom_call.1} parent=47 // pred_check
          %p633 = pneg %p222
        $region70: #{tpu_custom_call.1} parent=47 // pred_check_branch
          %635 = sbr.rel (%p633) target = $region72
        $region71: #{tpu_custom_call.1} parent=47 // pred_region
          %s637 = ssub.s32 128, 128
          %638 = vsyncadd %s629, %s637
          %s639 = smul.addr %s29, 128
          %s640 = scalar_lea.hbm %s7, %s639
          %s642 = sshll.u32 %s632, 4
          %s643 = int_to_ptr.vmem [resolvable:$true] %s642
          %645 = dma.vmem_to_hbm [thread:$0]  %s643, 128, %s640, %s629
        $region72: #{tpu_custom_call.1} parent=47 // pred_fallthru
          _
      $region48: #{tpu_custom_call.1} parent=5 // pred_fallthru
        _
      %p646 = scmp.le.s32.totalorder 2, %s20
      // Predicated region
      $region73: #{tpu_custom_call.1} parent=5 // pred_check
        %p647 = pneg %p646
      $region74: #{tpu_custom_call.1} parent=5 // pred_check_branch
        %649 = sbr.rel (%p647) target = $region76
      $region75: #{tpu_custom_call.1} parent=5 // pred_region
        %s650 = ssub.s32 %s20, 2
        // Predicated region
        $region77: #{tpu_custom_call.1} parent=75 // pred_check
          %p651 = pneg %p228
        $region78: #{tpu_custom_call.1} parent=75 // pred_check_branch
          %653 = sbr.rel (%p651) target = $region80
        $region79: #{tpu_custom_call.1} parent=75 // pred_region
          %s654 = sand.u32 %s213, 1
          %s655 = scalar_lea.sflag [#allocation6], %s654
          %s656 = sand.u32 %s213, 1
          %s657 = smul.addr %s656, 8
          %s658 = scalar_lea.vmem [#allocation10], %s657
          %659 = dma.done %s655, 128
        $region80: #{tpu_custom_call.1} parent=75 // pred_fallthru
          _
      $region76: #{tpu_custom_call.1} parent=5 // pred_fallthru
        _
    $region6: #{tpu_custom_call.1} parent=1 // loop_footer
      %s24 = sadd.s32 1, %s20
    $region7: #{tpu_custom_call.1} parent=1 // loop_footer_branch
      %19 = sbr.rel target = $region3
    $region8: #{tpu_custom_call.1} parent=1 // loop_exit
      _
    %660 = vsyncpa [#allocation5], 1
    %s661 = scalar_lea.sflag [#allocation5], 1
    %662 = vsyncpa %s661, 1
    %663 = vsyncpa [#allocation8], 1
    %664 = vsyncpa [#allocation6], 1
    %s665 = scalar_lea.sflag [#allocation6], 1
    %666 = vsyncpa %s665, 1

// kernel: tpu_custom_call.1
$region0: #{tpu_custom_call.1}
  #allocation0 [shape = 'u32[]', space=smem, size = 0x4, offset = 0x4, fixed_abs, tag = 'smem constant byte address 0x4 - core index']
  #allocation1 [shape = 'u32[144,128]{1,0:T(1,128)}', space=vmem, size = 0x12000, scoped, tag = 'internal scratch']
  #allocation2 [shape = 'f32[8,128]{1,0:T(8,128)}', space=vmem, size = 0x1000, scoped, tag = 'scratch operand']
  #allocation3 [shape = 'f32[8,128]{1,0:T(8,128)}', space=vmem, size = 0x1000, scoped, tag = 'scratch operand']
  %s0 = inlined_call_operand.hbm [shape: f32[16,128], index: 0, kind: input, shape index: {}]
  %s1 = inlined_call_operand.vmem [shape: f32[1,128], index: 1, kind: input, shape index: {}]
  %s2 = inlined_call_operand.vmem [shape: f32[1,128], index: 2, kind: input, shape index: {}]
  %s3 = inlined_call_operand.hbm [shape: f32[128,128], index: 3, kind: input, shape index: {}]
  %s4 = inlined_call_operand.vmem [shape: f32[1,128], index: 4, kind: input, shape index: {}]
  %s5 = inlined_call_operand.hbm [shape: f32[128,128], index: 5, kind: input, shape index: {}]
  %s6 = inlined_call_operand.vmem [shape: f32[1,128], index: 6, kind: input, shape index: {}]
  %s7 = inlined_call_operand.hbm [shape: f32[16,128], index: 7, kind: output, shape index: {}]
  %s8 = sld [smem:[#allocation0]]
  $region81: #{tpu_custom_call.1} parent=0
    _
  %s10 = ssub.s32 1, %s8
  %s11 = scalar_select 0, %s10, %s8
  $region1: #{tpu_custom_call.1} parent=0
    #allocation4 [shape = 'u8[8192]{0}', space=vmem, size = 0x2000, scoped, tag = 'input window, operand 0']
    #allocation5 [shape = 's32[2]{0}', space=sflag, size = 0x8, scoped, tag = 'scoped memory for tpu_custom_call.1']
    #allocation6 [shape = 's32[2]{0}', space=sflag, size = 0x8, scoped, tag = 'scoped memory for tpu_custom_call.1']
    #allocation7 [shape = 'u8[65536]{0}', space=vmem, size = 0x10000, scoped, tag = 'input window, operand 3, single buffered']
    #allocation8 [shape = 's32[1]{0}', space=sflag, size = 0x4, scoped, tag = 'scoped memory for tpu_custom_call.1']
    #allocation9 [shape = 'u8[65536]{0}', space=vmem, size = 0x10000, scoped, tag = 'input window, operand 5, single buffered']
    #allocation10 [shape = 'u8[8192]{0}', space=vmem, size = 0x2000, scoped, tag = 'output window, operand 0']
    %12 = vsyncpa [#allocation5], 0
    %s13 = scalar_lea.sflag [#allocation5], 1
    %14 = vsyncpa %s13, 0
    %15 = vsyncpa [#allocation8], 0
    %16 = vsyncpa [#allocation6], 0
    %s17 = scalar_lea.sflag [#allocation6], 1
    %18 = vsyncpa %s17, 0
    loop: start=0, step=1, limit=4
    $region2: #{tpu_custom_call.1} parent=1 // loop_pre_header
      _
    $region3: #{tpu_custom_call.1} parent=1 // loop_header
      %s20 = sphi 0, %s24
      %p21 = scmp.ge.s32.totalorder %s20, 4
      %s27 = sphi 0, %s39
      %s28 = sphi 0, %s35
      %s29 = sphi 0, %s27
      %s30 = sphi 0, %s28
      %s31 = sphi 0, %s29
      %s32 = sphi 0, %s30
      %s42 = sphi 0, %s44
      %s45 = sphi 0, %s42
      %s46 = sphi 0, %s45
      %s62 = sphi 0, %s46
      %s66 = sphi 0, %s66
      %s68 = sphi 0, %s66
      %s69 = sphi 0, %s68
      %s83 = sphi 0, %s69
      %s87 = sphi 0, %s87
      %s89 = sphi 0, %s87
      %s90 = sphi 0, %s89
      %s104 = sphi 0, %s90
      %s110 = sphi 0, %s112
      %s113 = sphi 0, %s110
      %s114 = sphi 0, %s113
      %s130 = sphi 0, %s114
      %s136 = sphi 0, %s138
      %s139 = sphi 0, %s136
      %s140 = sphi 0, %s139
      %s156 = sphi 0, %s140
      %s162 = sphi 0, %s164
      %s165 = sphi 0, %s162
      %s166 = sphi 0, %s165
      %s182 = sphi 0, %s166
      %s186 = sphi 0, %s186
      %s188 = sphi 0, %s186
      %s189 = sphi 0, %s188
      %s203 = sphi 0, %s189
      %s209 = sphi 0, %s211
      %s212 = sphi 0, %s209
      %s213 = sphi 0, %s212
      %s229 = sphi 0, %s213
    $region4: #{tpu_custom_call.1} parent=1 // loop_header_branch
      %23 = sbr.rel (%p21) target = $region8
    $region5: #{tpu_custom_call.1} parent=1 // loop_body
      %s25 = ssub.s32 %s20, 1
      %s26 = ssub.s32 %s20, 2
      %s33 = sadd.s32 1, %s28
      %p34 = scmp.ge.s32.totalorder %s33, 1
      %s35 = scalar_select %p34, 0, %s33
      %s36 = sadd.s32 1, %s27
      %s37 = scalar_select %p34, %s36, %s27
      %p38 = scmp.ge.s32.totalorder %s37, 2
      %s39 = scalar_select %p38, 0, %s37
      %s40 = ssub.s32 %s27, %s39
      %p41 = scmp.eq.s32.totalorder %s40, 0
      %s43 = sadd.s32 %s42, 1
      %s44 = scalar_select %p41, %s42, %s43
      %p47 = pneg %p41
      %p48 = scmp.eq.s32.totalorder %s20, 1
      %p49 = por %p47, %p48
      %p50 = scmp.ne.s32.totalorder %s42, %s45
      %p51 = scmp.eq.s32.totalorder %s20, 0
      %p52 = por %p50, %p51
      %p53 = scmp.ne.s32.totalorder %s42, %s45
      %p54 = scmp.eq.s32.totalorder %s25, 1
      %p55 = por %p53, %p54
      %p56 = scmp.ne.s32.totalorder %s45, %s46
      %p57 = scmp.eq.s32.totalorder %s25, 0
      %p58 = por %p56, %p57
      %p59 = scmp.ne.s32.totalorder %s45, %s46
      %p60 = scmp.eq.s32.totalorder %s26, 1
      %p61 = por %p59, %p60
      %p63 = scmp.ne.s32.totalorder %s46, %s62
      %p64 = scmp.eq.s32.totalorder %s26, 0
      %p65 = por %p63, %p64
      %s67 = sadd.s32 %s66, 1
      %p70 = scmp.eq.s32.totalorder %s20, 1
      %p71 = scmp.ne.s32.totalorder %s66, %s68
      %p72 = scmp.eq.s32.totalorder %s20, 0
      %p73 = por %p71, %p72
      %p74 = scmp.ne.s32.totalorder %s66, %s68
      %p75 = scmp.eq.s32.totalorder %s25, 1
      %p76 = por %p74, %p75
      %p77 = scmp.ne.s32.totalorder %s68, %s69
      %p78 = scmp.eq.s32.totalorder %s25, 0
      %p79 = por %p77, %p78
      %p80 = scmp.ne.s32.totalorder %s68, %s69
      %p81 = scmp.eq.s32.totalorder %s26, 1
      %p82 = por %p80, %p81
      %p84 = scmp.ne.s32.totalorder %s69, %s83
      %p85 = scmp.eq.s32.totalorder %s26, 0
      %p86 = por %p84, %p85
      %s88 = sadd.s32 %s87, 1
      %p91 = scmp.eq.s32.totalorder %s20, 1
      %p92 = scmp.ne.s32.totalorder %s87, %s89
      %p93 = scmp.eq.s32.totalorder %s20, 0
      %p94 = por %p92, %p93
      %p95 = scmp.ne.s32.totalorder %s87, %s89
      %p96 = scmp.eq.s32.totalorder %s25, 1
      %p97 = por %p95, %p96
      %p98 = scmp.ne.s32.totalorder %s89, %s90
      %p99 = scmp.eq.s32.totalorder %s25, 0
      %p100 = por %p98, %p99
      %p101 = scmp.ne.s32.totalorder %s89, %s90
      %p102 = scmp.eq.s32.totalorder %s26, 1
      %p103 = por %p101, %p102
      %p105 = scmp.ne.s32.totalorder %s90, %s104
      %p106 = scmp.eq.s32.totalorder %s26, 0
      %p107 = por %p105, %p106
      %s108 = ssub.s32 %s28, %s35
      %p109 = scmp.eq.s32.totalorder %s108, 0
      %s111 = sadd.s32 %s110, 1
      %s112 = scalar_select %p109, %s110, %s111
      %p115 = pneg %p109
      %p116 = scmp.eq.s32.totalorder %s20, 1
      %p117 = por %p115, %p116
      %p118 = scmp.ne.s32.totalorder %s110, %s113
      %p119 = scmp.eq.s32.totalorder %s20, 0
      %p120 = por %p118, %p119
      %p121 = scmp.ne.s32.totalorder %s110, %s113
      %p122 = scmp.eq.s32.totalorder %s25, 1
      %p123 = por %p121, %p122
      %p124 = scmp.ne.s32.totalorder %s113, %s114
      %p125 = scmp.eq.s32.totalorder %s25, 0
      %p126 = por %p124, %p125
      %p127 = scmp.ne.s32.totalorder %s113, %s114
      %p128 = scmp.eq.s32.totalorder %s26, 1
      %p129 = por %p127, %p128
      %p131 = scmp.ne.s32.totalorder %s114, %s130
      %p132 = scmp.eq.s32.totalorder %s26, 0
      %p133 = por %p131, %p132
      %s134 = ssub.s32 %s28, %s35
      %p135 = scmp.eq.s32.totalorder %s134, 0
      %s137 = sadd.s32 %s136, 1
      %s138 = scalar_select %p135, %s136, %s137
      %p141 = pneg %p135
      %p142 = scmp.eq.s32.totalorder %s20, 1
      %p143 = por %p141, %p142
      %p144 = scmp.ne.s32.totalorder %s136, %s139
      %p145 = scmp.eq.s32.totalorder %s20, 0
      %p146 = por %p144, %p145
      %p147 = scmp.ne.s32.totalorder %s136, %s139
      %p148 = scmp.eq.s32.totalorder %s25, 1
      %p149 = por %p147, %p148
      %p150 = scmp.ne.s32.totalorder %s139, %s140
      %p151 = scmp.eq.s32.totalorder %s25, 0
      %p152 = por %p150, %p151
      %p153 = scmp.ne.s32.totalorder %s139, %s140
      %p154 = scmp.eq.s32.totalorder %s26, 1
      %p155 = por %p153, %p154
      %p157 = scmp.ne.s32.totalorder %s140, %s156
      %p158 = scmp.eq.s32.totalorder %s26, 0
      %p159 = por %p157, %p158
      %s160 = ssub.s32 %s28, %s35
      %p161 = scmp.eq.s32.totalorder %s160, 0
      %s163 = sadd.s32 %s162, 1
      %s164 = scalar_select %p161, %s162, %s163
      %p167 = pneg %p161
      %p168 = scmp.eq.s32.totalorder %s20, 1
      %p169 = por %p167, %p168
      %p170 = scmp.ne.s32.totalorder %s162, %s165
      %p171 = scmp.eq.s32.totalorder %s20, 0
      %p172 = por %p170, %p171
      %p173 = scmp.ne.s32.totalorder %s162, %s165
      %p174 = scmp.eq.s32.totalorder %s25, 1
      %p175 = por %p173, %p174
      %p176 = scmp.ne.s32.totalorder %s165, %s166
      %p177 = scmp.eq.s32.totalorder %s25, 0
      %p178 = por %p176, %p177
      %p179 = scmp.ne.s32.totalorder %s165, %s166
      %p180 = scmp.eq.s32.totalorder %s26, 1
      %p181 = por %p179, %p180
      %p183 = scmp.ne.s32.totalorder %s166, %s182
      %p184 = scmp.eq.s32.totalorder %s26, 0
      %p185 = por %p183, %p184
      %s187 = sadd.s32 %s186, 1
      %p190 = scmp.eq.s32.totalorder %s20, 1
      %p191 = scmp.ne.s32.totalorder %s186, %s188
      %p192 = scmp.eq.s32.totalorder %s20, 0
      %p193 = por %p191, %p192
      %p194 = scmp.ne.s32.totalorder %s186, %s188
      %p195 = scmp.eq.s32.totalorder %s25, 1
      %p196 = por %p194, %p195
      %p197 = scmp.ne.s32.totalorder %s188, %s189
      %p198 = scmp.eq.s32.totalorder %s25, 0
      %p199 = por %p197, %p198
      %p200 = scmp.ne.s32.totalorder %s188, %s189
      %p201 = scmp.eq.s32.totalorder %s26, 1
      %p202 = por %p200, %p201
      %p204 = scmp.ne.s32.totalorder %s189, %s203
      %p205 = scmp.eq.s32.totalorder %s26, 0
      %p206 = por %p204, %p205
      %s207 = ssub.s32 %s27, %s39
      %p208 = scmp.eq.s32.totalorder %s207, 0
      %s210 = sadd.s32 %s209, 1
      %s211 = scalar_select %p208, %s209, %s210
      %p214 = pneg %p208
      %p215 = scmp.eq.s32.totalorder %s20, 1
      %p216 = por %p214, %p215
      %p217 = scmp.ne.s32.totalorder %s209, %s212
      %p218 = scmp.eq.s32.totalorder %s20, 0
      %p219 = por %p217, %p218
      %p220 = scmp.ne.s32.totalorder %s209, %s212
      %p221 = scmp.eq.s32.totalorder %s25, 1
      %p222 = por %p220, %p221
      %p223 = scmp.ne.s32.totalorder %s212, %s213
      %p224 = scmp.eq.s32.totalorder %s25, 0
      %p225 = por %p223, %p224
      %p226 = scmp.ne.s32.totalorder %s212, %s213
      %p227 = scmp.eq.s32.totalorder %s26, 1
      %p228 = por %p226, %p227
      %p230 = scmp.ne.s32.totalorder %s213, %s229
      %p231 = scmp.eq.s32.totalorder %s26, 0
      %p232 = por %p230, %p231
      %p233 = scmp.le.s32.totalorder 1, %s20
      %p234 = scmp.lt.s32.totalorder %s20, 3
      %p235 = pnand %p233, %p234
      %p236 = pneg %p235
      // Predicated region
      $region9: #{tpu_custom_call.1} parent=5 // pred_check
        _
      $region10: #{tpu_custom_call.1} parent=5 // pred_check_branch
        %238 = sbr.rel (%p235) target = $region12
      $region11: #{tpu_custom_call.1} parent=5 // pred_region
        %s239 = ssub.s32 %s20, 1
        // Predicated region
        $region13: #{tpu_custom_call.1} parent=11 // pred_check
          %p240 = pneg %p79
        $region14: #{tpu_custom_call.1} parent=11 // pred_check_branch
          %242 = sbr.rel (%p240) target = $region16
        $region15: #{tpu_custom_call.1} parent=11 // pred_region
          _
        $region16: #{tpu_custom_call.1} parent=11 // pred_fallthru
          _
        // Predicated region
        $region17: #{tpu_custom_call.1} parent=11 // pred_check
          %p243 = pneg %p100
        $region18: #{tpu_custom_call.1} parent=11 // pred_check_branch
          %245 = sbr.rel (%p243) target = $region20
        $region19: #{tpu_custom_call.1} parent=11 // pred_region
          _
        $region20: #{tpu_custom_call.1} parent=11 // pred_fallthru
          _
        // Predicated region
        $region21: #{tpu_custom_call.1} parent=11 // pred_check
          %p246 = pneg %p126
        $region22: #{tpu_custom_call.1} parent=11 // pred_check_branch
          %248 = sbr.rel (%p246) target = $region24
        $region23: #{tpu_custom_call.1} parent=11 // pred_region
          %s250 = ssub.s32 2048, 2048
          %251 = vsyncadd [#allocation8], %s250
          %s252 = smul.addr %s30, 128
          %s253 = scalar_lea.hbm %s3, %s252
          %s254 = sshll.u32 [#allocation7], 4
          %s255 = int_to_ptr.vmem [resolvable:$true] %s254
          %260 = dma.hbm_to_vmem [thread:$0]  %s253, 2048, %s255, [#allocation8], 128, 128, 8
        $region24: #{tpu_custom_call.1} parent=11 // pred_fallthru
          _
        // Predicated region
        $region25: #{tpu_custom_call.1} parent=11 // pred_check
          %p261 = pneg %p152
        $region26: #{tpu_custom_call.1} parent=11 // pred_check_branch
          %263 = sbr.rel (%p261) target = $region28
        $region27: #{tpu_custom_call.1} parent=11 // pred_region
          %p264 = scmp.lt.s32.totalorder %s30, 0
          %s265 = scalar_select %p264, %s30, 0
          %s266 = scalar_lea.vmem %s4, %s265
        $region28: #{tpu_custom_call.1} parent=11 // pred_fallthru
          _
        // Predicated region
        $region29: #{tpu_custom_call.1} parent=11 // pred_check
          %p267 = pneg %p178
        $region30: #{tpu_custom_call.1} parent=11 // pred_check_branch
          %269 = sbr.rel (%p267) target = $region32
        $region31: #{tpu_custom_call.1} parent=11 // pred_region
          %s270 = smul.u32 16, %s30
          %s272 = ssub.s32 2048, 2048
          %273 = vsyncadd [#allocation8], %s272
          %s274 = smul.addr %s270, 128
          %s275 = scalar_lea.hbm %s5, %s274
          %s276 = sshll.u32 [#allocation9], 4
          %s277 = int_to_ptr.vmem [resolvable:$true] %s276
          %282 = dma.hbm_to_vmem [thread:$0]  %s275, 2048, %s277, [#allocation8], 128, 128, 8
        $region32: #{tpu_custom_call.1} parent=11 // pred_fallthru
          _
        // Predicated region
        $region33: #{tpu_custom_call.1} parent=11 // pred_check
          %p283 = pneg %p199
        $region34: #{tpu_custom_call.1} parent=11 // pred_check_branch
          %285 = sbr.rel (%p283) target = $region36
        $region35: #{tpu_custom_call.1} parent=11 // pred_region
          _
        $region36: #{tpu_custom_call.1} parent=11 // pred_fallthru
          _
      $region12: #{tpu_custom_call.1} parent=5 // pred_fallthru
        _
      %p286 = scmp.lt.s32.totalorder %s20, 2
      // Predicated region
      $region37: #{tpu_custom_call.1} parent=5 // pred_check
        %p287 = pneg %p286
      $region38: #{tpu_custom_call.1} parent=5 // pred_check_branch
        %289 = sbr.rel (%p287) target = $region40
      $region39: #{tpu_custom_call.1} parent=5 // pred_region
        // Predicated region
        $region41: #{tpu_custom_call.1} parent=39 // pred_check
          %p290 = pneg %p52
        $region42: #{tpu_custom_call.1} parent=39 // pred_check_branch
          %292 = sbr.rel (%p290) target = $region44
        $region43: #{tpu_custom_call.1} parent=39 // pred_region
          %s293 = sand.u32 %s42, 1
          %s294 = scalar_lea.sflag [#allocation5], %s293
          %s295 = sand.u32 %s42, 1
          %s296 = smul.addr %s295, 8
          %s297 = scalar_lea.vmem [#allocation4], %s296
          %s299 = ssub.s32 128, 128
          %300 = vsyncadd %s294, %s299
          %s301 = smul.addr %s27, 128
          %s302 = scalar_lea.hbm %s0, %s301
          %s304 = sshll.u32 %s297, 4
          %s305 = int_to_ptr.vmem [resolvable:$true] %s304
          %307 = dma.hbm_to_vmem [thread:$0]  %s302, 128, %s305, %s294
        $region44: #{tpu_custom_call.1} parent=39 // pred_fallthru
          _
      $region40: #{tpu_custom_call.1} parent=5 // pred_fallthru
        _
      %p308 = scmp.le.s32.totalorder 1, %s20
      %p309 = scmp.lt.s32.totalorder %s20, 3
      %p310 = pnand %p308, %p309
      %p311 = pneg %p310
      // Predicated region
      $region45: #{tpu_custom_call.1} parent=5 // pred_check
        _
      $region46: #{tpu_custom_call.1} parent=5 // pred_check_branch
        %313 = sbr.rel (%p310) target = $region48
      $region47: #{tpu_custom_call.1} parent=5 // pred_region
        %s314 = ssub.s32 %s20, 1
        %s315 = sand.u32 %s45, 1
        %s316 = scalar_lea.sflag [#allocation5], %s315
        %s317 = sand.u32 %s45, 1
        %s318 = smul.addr %s317, 8
        %s319 = scalar_lea.vmem [#allocation4], %s318
        // Predicated region
        $region49: #{tpu_custom_call.1} parent=47 // pred_check
          %p320 = pneg %p58
        $region50: #{tpu_custom_call.1} parent=47 // pred_check_branch
          %322 = sbr.rel (%p320) target = $region52
        $region51: #{tpu_custom_call.1} parent=47 // pred_region
          %323 = dma.done %s316, 128
        $region52: #{tpu_custom_call.1} parent=47 // pred_fallthru
          _
        // Predicated region
        $region53: #{tpu_custom_call.1} parent=47 // pred_check
          %p324 = pneg %p126
        $region54: #{tpu_custom_call.1} parent=47 // pred_check_branch
          %326 = sbr.rel (%p324) target = $region56
        $region55: #{tpu_custom_call.1} parent=47 // pred_region
          %327 = dma.done [#allocation8], 2048
        $region56: #{tpu_custom_call.1} parent=47 // pred_fallthru
          _
        // Predicated region
        $region57: #{tpu_custom_call.1} parent=47 // pred_check
          %p328 = pneg %p178
        $region58: #{tpu_custom_call.1} parent=47 // pred_check_branch
          %330 = sbr.rel (%p328) target = $region60
        $region59: #{tpu_custom_call.1} parent=47 // pred_region
          %331 = dma.done [#allocation8], 2048
        $region60: #{tpu_custom_call.1} parent=47 // pred_fallthru
          _
        %s332 = sand.u32 %s45, 1
        %s333 = scalar_lea.sflag [#allocation5], %s332
        %s334 = sand.u32 %s45, 1
        %s335 = smul.addr %s334, 8
        %s336 = scalar_lea.vmem [#allocation4], %s335
        %p337 = pneg %p58
        %p338 = pneg %p55
        %p339 = pneg %p79
        %p340 = pneg %p76
        %p341 = pneg %p100
        %p342 = pneg %p97
        %p343 = pneg %p126
        %p344 = pneg %p123
        %p345 = scmp.lt.s32.totalorder %s30, 0
        %s346 = scalar_select %p345, %s30, 0
        %s347 = scalar_lea.vmem %s4, %s346
        %p348 = pneg %p152
        %p349 = pneg %p149
        %p350 = pneg %p178
        %p351 = pneg %p175
        %p352 = pneg %p199
        %p353 = pneg %p196
        %p354 = pneg %p225
        %p355 = pneg %p222
        %s356 = sand.u32 %s212, 1
        %s357 = scalar_lea.sflag [#allocation6], %s356
        %s358 = sand.u32 %s212, 1
        %s359 = smul.addr %s358, 8
        %s360 = scalar_lea.vmem [#allocation10], %s359
        %p361 = scmp.lt.s32.totalorder %s30, 0
        %s362 = scalar_select %p361, %s30, 0
        %s363 = scalar_lea.vmem %s4, %s362
        %s364 = smul.u32 16, %s30
        %p365 = scmp.eq.s32.totalorder %s30, 0
        // Predicated region
        $region61: #{tpu_custom_call.1} parent=47 // pred_check
          %p366 = pneg %p365
        $region62: #{tpu_custom_call.1} parent=47 // pred_check_branch
          %368 = sbr.rel (%p366) target = $region64
        $region63: #{tpu_custom_call.1} parent=47 // pred_region
          %v369 = vld [vmem:[%s319] sm:$0xff]
          %370 = vadd.xlane.f32.xlu0 %v369
          %v371 = vpop.xlane.xlu0 %370
          %v372 = vmul.f32 %v371, 0.03125
          %v373 = vsub.f32 %v369, %v372
          %v374 = vlaneseq
          %v375 = vand.u32 %v374, 127
          %vm376 = vcmp.lt.s32.totalorder %v375, 32
          %v377 = vsel %vm376, 1, 0
          %vm378 = vcmp.eq.s32.totalorder %v377, 1
          %v379 = vsel %vm378, %v373, 0.0
          %v380 = vmul.f32 %v379, %v379
          %381 = vadd.xlane.f32.xlu0 %v380
          %v382 = vpop.xlane.xlu0 %381
          %v383 = vmul.f32 %v382, 0.03125
          %v384 = vadd.f32 %v383, 1e-05
          %v385 = vrsqrt.pop %v384
          %v386 = vmul.f32 %v379, %v385
          %v387 = vld [vmem:[%s1] sm:$0x1]
          %v389 = vlaneseq
          %v390 = vshrl.u32 %v389, 7
          %v391 = vsub.s32 0, %v390
          %v392 = vrot.slane %v387, %v391
          %v394 = vmul.f32 %v386, %v392
          %v395 = vld [vmem:[%s2] sm:$0x1]
          %v397 = vlaneseq
          %v398 = vshrl.u32 %v397, 7
          %v399 = vsub.s32 0, %v398
          %v400 = vrot.slane %v395, %v399
          %v402 = vadd.f32 %v394, %v400
          %403 = vst [vmem:[#allocation2] sm:$0xff] %v402
          %404 = vst [vmem:[#allocation3] sm:$0xff] 0.0
        $region64: #{tpu_custom_call.1} parent=47 // pred_fallthru
          _
        %v405 = vld [vmem:[#allocation2] sm:$0xff]
        %v406 = vld [vmem:[#allocation7] sm:$0xff]
        %v407 = vld [vmem:[#allocation7 + $0x8] sm:$0xff]
        %v408 = vld [vmem:[#allocation7 + $0x10] sm:$0xff]
        %v409 = vld [vmem:[#allocation7 + $0x18] sm:$0xff]
        %v410 = vld [vmem:[#allocation7 + $0x20] sm:$0xff]
        %v411 = vld [vmem:[#allocation7 + $0x28] sm:$0xff]
        %v412 = vld [vmem:[#allocation7 + $0x30] sm:$0xff]
        %v413 = vld [vmem:[#allocation7 + $0x38] sm:$0xff]
        %v414 = vld [vmem:[#allocation7 + $0x40] sm:$0xff]
        %v415 = vld [vmem:[#allocation7 + $0x48] sm:$0xff]
        %v416 = vld [vmem:[#allocation7 + $0x50] sm:$0xff]
        %v417 = vld [vmem:[#allocation7 + $0x58] sm:$0xff]
        %v418 = vld [vmem:[#allocation7 + $0x60] sm:$0xff]
        %v419 = vld [vmem:[#allocation7 + $0x68] sm:$0xff]
        %v420 = vld [vmem:[#allocation7 + $0x70] sm:$0xff]
        %v421 = vld [vmem:[#allocation7 + $0x78] sm:$0xff]
        %v422 = vld [vmem:[%s363] sm:$0x1]
        %v424 = vlaneseq
        %v425 = vshrl.u32 %v424, 7
        %v426 = vsub.s32 0, %v425
        %v427 = vrot.slane %v422, %v426
        %429 = vmatprep.subr.mxu0 0.0
        %430 = vmatpush1.msra.mxu0 %v406
        %431 = vmatprep.subr.mxu0 0.0
        %432 = vmatpush1.msra.mxu0 %v407
        %433 = vmatprep.subr.mxu0 0.0
        %434 = vmatpush1.msra.mxu0 %v408
        %435 = vmatprep.subr.mxu0 0.0
        %436 = vmatpush1.msra.mxu0 %v409
        %437 = vmatprep.subr.mxu0 0.0
        %438 = vmatpush1.msra.mxu0 %v410
        %439 = vmatprep.subr.mxu0 0.0
        %440 = vmatpush1.msra.mxu0 %v411
        %441 = vmatprep.subr.mxu0 0.0
        %442 = vmatpush1.msra.mxu0 %v412
        %443 = vmatprep.subr.mxu0 0.0
        %444 = vmatpush1.msra.mxu0 %v413
        %445 = vmatprep.subr.mxu0 0.0
        %446 = vmatpush1.msra.mxu0 %v414
        %447 = vmatprep.subr.mxu0 0.0
        %448 = vmatpush1.msra.mxu0 %v415
        %449 = vmatprep.subr.mxu0 0.0
        %450 = vmatpush1.msra.mxu0 %v416
        %451 = vmatprep.subr.mxu0 0.0
        %452 = vmatpush1.msra.mxu0 %v417
        %453 = vmatprep.subr.mxu0 0.0
        %454 = vmatpush1.msra.mxu0 %v418
        %455 = vmatprep.subr.mxu0 0.0
        %456 = vmatpush1.msra.mxu0 %v419
        %457 = vmatprep.subr.mxu0 0.0
        %458 = vmatpush1.msra.mxu0 %v420
        %459 = vmatprep.subr.mxu0 0.0
        %460 = vmatpush1.msra.mxu0 %v421
        %461 = vmatprep.subr.mxu0 0.0
        %462 = vmatpush1.msra.mxu0 0.0
        %463 = vmatprep.subr.mxu0 0.0
        %464 = vmatpush1.msra.mxu0 0.0
        %465 = vmatprep.subr.mxu0 0.0
        %466 = vmatpush1.msra.mxu0 0.0
        %467 = vmatprep.subr.mxu0 0.0
        %468 = vmatpush1.msra.mxu0 0.0
        %469 = vmatprep.subr.mxu0 0.0
        %470 = vmatpush1.msra.mxu0 0.0
        %471 = vmatprep.subr.mxu0 0.0
        %472 = vmatpush1.msra.mxu0 0.0
        %473 = vmatprep.subr.mxu0 0.0
        %474 = vmatpush1.msra.mxu0 0.0
        %475 = vmatprep.subr.mxu0 0.0
        %476 = vmatpush1.msra.mxu0 0.0
        %477 = vmatprep.subr.mxu0 0.0
        %478 = vmatpush1.msra.mxu0 0.0
        %479 = vmatprep.subr.mxu0 0.0
        %480 = vmatpush1.msra.mxu0 0.0
        %481 = vmatprep.subr.mxu0 0.0
        %482 = vmatpush1.msra.mxu0 0.0
        %483 = vmatprep.subr.mxu0 0.0
        %484 = vmatpush1.msra.mxu0 0.0
        %485 = vmatprep.subr.mxu0 0.0
        %486 = vmatpush1.msra.mxu0 0.0
        %487 = vmatprep.subr.mxu0 0.0
        %488 = vmatpush1.msra.mxu0 0.0
        %489 = vmatprep.subr.mxu0 0.0
        %490 = vmatpush1.msra.mxu0 0.0
        %491 = vmatprep.subr.mxu0 0.0
        %492 = vmatpush1.msra.mxu0 0.0
        %493 = vmatprep.mubr.f32.mxu0 0.0
        %494 = vmatmul.mubr.f32.gmra.mrb[0].mxu0 %v405
        %v495 = vpop.f32.mrb[0].mxu0
        %v496 = vadd.f32 %v427, %v495
        %v497 = vpop.f32.mrb[0].mxu0
        %498 = vdwg.mxu0
        %v499 = vmul.f32 %v496, 0.5
        %v500 = vmul.f32 %v496, 0.70710677
        %v501 = vand.u32 2147483647, %v500
        %v502 = vmul.f32 %v501, 0.3275911
        %v503 = vadd.f32 %v502, 1.0
        %v504 = vrcp.pop %v503
        %v505 = vmul.f32 1.0, %v504
        %v506 = vmul.f32 %v505, 1.0614054
        %v507 = vadd.f32 %v506, -1.4531521
        %v508 = vmul.f32 %v507, %v505
        %v509 = vadd.f32 %v508, 1.4214138
        %v510 = vmul.f32 %v509, %v505
        %v511 = vadd.f32 %v510, -0.28449672
        %v512 = vmul.f32 %v511, %v505
        %v513 = vadd.f32 %v512, 0.2548296
        %v514 = vmul.f32 %v513, %v505
        %v515 = vsub.f32 0.0, %v501
        %v516 = vmul.f32 %v515, %v501
        %v517 = vmul.f32 %v516, 1.442695
        %v518 = vpow.pop %v517
        %v519 = vmul.f32 %v514, %v518
        %v520 = vsub.f32 1.0, %v519
        %vm521 = vcmp.ge.f32.partialorder %v500, 0.0
        %v522 = vsub.f32 0.0, %v520
        %v523 = vsel %vm521, %v520, %v522
        %v524 = vadd.f32 %v523, 1.0
        %v525 = vmul.f32 %v499, %v524
        %v526 = vld [vmem:[#allocation3] sm:$0xff]
        %v527 = vld [vmem:[#allocation9] sm:$0xff]
        %v528 = vld [vmem:[#allocation9 + $0x8] sm:$0xff]
        %v529 = vld [vmem:[#allocation9 + $0x10] sm:$0xff]
        %v530 = vld [vmem:[#allocation9 + $0x18] sm:$0xff]
        %v531 = vld [vmem:[#allocation9 + $0x20] sm:$0xff]
        %v532 = vld [vmem:[#allocation9 + $0x28] sm:$0xff]
        %v533 = vld [vmem:[#allocation9 + $0x30] sm:$0xff]
        %v534 = vld [vmem:[#allocation9 + $0x38] sm:$0xff]
        %v535 = vld [vmem:[#allocation9 + $0x40] sm:$0xff]
        %v536 = vld [vmem:[#allocation9 + $0x48] sm:$0xff]
        %v537 = vld [vmem:[#allocation9 + $0x50] sm:$0xff]
        %v538 = vld [vmem:[#allocation9 + $0x58] sm:$0xff]
        %v539 = vld [vmem:[#allocation9 + $0x60] sm:$0xff]
        %v540 = vld [vmem:[#allocation9 + $0x68] sm:$0xff]
        %v541 = vld [vmem:[#allocation9 + $0x70] sm:$0xff]
        %v542 = vld [vmem:[#allocation9 + $0x78] sm:$0xff]
        %543 = vmatprep.subr.mxu0 0.0
        %544 = vmatpush1.msra.mxu0 %v527
        %545 = vmatprep.subr.mxu0 0.0
        %546 = vmatpush1.msra.mxu0 %v528
        %547 = vmatprep.subr.mxu0 0.0
        %548 = vmatpush1.msra.mxu0 %v529
        %549 = vmatprep.subr.mxu0 0.0
        %550 = vmatpush1.msra.mxu0 %v530
        %551 = vmatprep.subr.mxu0 0.0
        %552 = vmatpush1.msra.mxu0 %v531
        %553 = vmatprep.subr.mxu0 0.0
        %554 = vmatpush1.msra.mxu0 %v532
        %555 = vmatprep.subr.mxu0 0.0
        %556 = vmatpush1.msra.mxu0 %v533
        %557 = vmatprep.subr.mxu0 0.0
        %558 = vmatpush1.msra.mxu0 %v534
        %559 = vmatprep.subr.mxu0 0.0
        %560 = vmatpush1.msra.mxu0 %v535
        %561 = vmatprep.subr.mxu0 0.0
        %562 = vmatpush1.msra.mxu0 %v536
        %563 = vmatprep.subr.mxu0 0.0
        %564 = vmatpush1.msra.mxu0 %v537
        %565 = vmatprep.subr.mxu0 0.0
        %566 = vmatpush1.msra.mxu0 %v538
        %567 = vmatprep.subr.mxu0 0.0
        %568 = vmatpush1.msra.mxu0 %v539
        %569 = vmatprep.subr.mxu0 0.0
        %570 = vmatpush1.msra.mxu0 %v540
        %571 = vmatprep.subr.mxu0 0.0
        %572 = vmatpush1.msra.mxu0 %v541
        %573 = vmatprep.subr.mxu0 0.0
        %574 = vmatpush1.msra.mxu0 %v542
        %575 = vmatprep.subr.mxu0 0.0
        %576 = vmatpush1.msra.mxu0 0.0
        %577 = vmatprep.subr.mxu0 0.0
        %578 = vmatpush1.msra.mxu0 0.0
        %579 = vmatprep.subr.mxu0 0.0
        %580 = vmatpush1.msra.mxu0 0.0
        %581 = vmatprep.subr.mxu0 0.0
        %582 = vmatpush1.msra.mxu0 0.0
        %583 = vmatprep.subr.mxu0 0.0
        %584 = vmatpush1.msra.mxu0 0.0
        %585 = vmatprep.subr.mxu0 0.0
        %586 = vmatpush1.msra.mxu0 0.0
        %587 = vmatprep.subr.mxu0 0.0
        %588 = vmatpush1.msra.mxu0 0.0
        %589 = vmatprep.subr.mxu0 0.0
        %590 = vmatpush1.msra.mxu0 0.0
        %591 = vmatprep.subr.mxu0 0.0
        %592 = vmatpush1.msra.mxu0 0.0
        %593 = vmatprep.subr.mxu0 0.0
        %594 = vmatpush1.msra.mxu0 0.0
        %595 = vmatprep.subr.mxu0 0.0
        %596 = vmatpush1.msra.mxu0 0.0
        %597 = vmatprep.subr.mxu0 0.0
        %598 = vmatpush1.msra.mxu0 0.0
        %599 = vmatprep.subr.mxu0 0.0
        %600 = vmatpush1.msra.mxu0 0.0
        %601 = vmatprep.subr.mxu0 0.0
        %602 = vmatpush1.msra.mxu0 0.0
        %603 = vmatprep.subr.mxu0 0.0
        %604 = vmatpush1.msra.mxu0 0.0
        %605 = vmatprep.subr.mxu0 0.0
        %606 = vmatpush1.msra.mxu0 0.0
        %607 = vmatprep.mubr.f32.mxu0 0.0
        %608 = vmatmul.mubr.f32.gmra.mrb[0].mxu0 %v525
        %v609 = vpop.f32.mrb[0].mxu0
        %v610 = vadd.f32 0.0, %v609
        %v611 = vpop.f32.mrb[0].mxu0
        %612 = vdwg.mxu0
        %v613 = vadd.f32 %v526, %v610
        %614 = vst [vmem:[#allocation3] sm:$0xff] %v613
        // Predicated region
        $region65: #{tpu_custom_call.1} parent=47 // pred_check
          %p615 = pneg %p365
        $region66: #{tpu_custom_call.1} parent=47 // pred_check_branch
          %617 = sbr.rel (%p615) target = $region68
        $region67: #{tpu_custom_call.1} parent=47 // pred_region
          %v618 = vld [vmem:[#allocation3] sm:$0xff]
          %v619 = vld [vmem:[%s6] sm:$0x1]
          %v621 = vlaneseq
          %v622 = vshrl.u32 %v621, 7
          %v623 = vsub.s32 0, %v622
          %v624 = vrot.slane %v619, %v623
          %v626 = vadd.f32 %v618, %v624
          %627 = vst [vmem:[%s360] sm:$0xff] %v626
        $region68: #{tpu_custom_call.1} parent=47 // pred_fallthru
          _
        %s628 = sand.u32 %s212, 1
        %s629 = scalar_lea.sflag [#allocation6], %s628
        %s630 = sand.u32 %s212, 1
        %s631 = smul.addr %s630, 8
        %s632 = scalar_lea.vmem [#allocation10], %s631
        // Predicated region
        $region69: #{tpu_custom_call.1} parent=47 // pred_check
          %p633 = pneg %p222
        $region70: #{tpu_custom_call.1} parent=47 // pred_check_branch
          %635 = sbr.rel (%p633) target = $region72
        $region71: #{tpu_custom_call.1} parent=47 // pred_region
          %s637 = ssub.s32 128, 128
          %638 = vsyncadd %s629, %s637
          %s639 = smul.addr %s29, 128
          %s640 = scalar_lea.hbm %s7, %s639
          %s642 = sshll.u32 %s632, 4
          %s643 = int_to_ptr.vmem [resolvable:$true] %s642
          %645 = dma.vmem_to_hbm [thread:$0]  %s643, 128, %s640, %s629
        $region72: #{tpu_custom_call.1} parent=47 // pred_fallthru
          _
      $region48: #{tpu_custom_call.1} parent=5 // pred_fallthru
        _
      %p646 = scmp.le.s32.totalorder 2, %s20
      // Predicated region
      $region73: #{tpu_custom_call.1} parent=5 // pred_check
        %p647 = pneg %p646
      $region74: #{tpu_custom_call.1} parent=5 // pred_check_branch
        %649 = sbr.rel (%p647) target = $region76
      $region75: #{tpu_custom_call.1} parent=5 // pred_region
        %s650 = ssub.s32 %s20, 2
        // Predicated region
        $region77: #{tpu_custom_call.1} parent=75 // pred_check
          %p651 = pneg %p228
        $region78: #{tpu_custom_call.1} parent=75 // pred_check_branch
          %653 = sbr.rel (%p651) target = $region80
        $region79: #{tpu_custom_call.1} parent=75 // pred_region
          %s654 = sand.u32 %s213, 1
          %s655 = scalar_lea.sflag [#allocation6], %s654
          %s656 = sand.u32 %s213, 1
          %s657 = smul.addr %s656, 8
          %s658 = scalar_lea.vmem [#allocation10], %s657
          %659 = dma.done %s655, 128
        $region80: #{tpu_custom_call.1} parent=75 // pred_fallthru
          _
      $region76: #{tpu_custom_call.1} parent=5 // pred_fallthru
        _
    $region6: #{tpu_custom_call.1} parent=1 // loop_footer
      %s24 = sadd.s32 1, %s20
    $region7: #{tpu_custom_call.1} parent=1 // loop_footer_branch
      %19 = sbr.rel target = $region3
    $region8: #{tpu_custom_call.1} parent=1 // loop_exit
      _
    %660 = vsyncpa [#allocation5], 1
    %s661 = scalar_lea.sflag [#allocation5], 1
    %662 = vsyncpa %s661, 1
    %663 = vsyncpa [#allocation8], 1
    %664 = vsyncpa [#allocation6], 1
    %s665 = scalar_lea.sflag [#allocation6], 1
    %666 = vsyncpa %s665, 1

</llo_original>
